<compile_context>
chip_gen: v6e
topology: v6e:2x2x1
jax: 0.10.0
libtpu: 0.0.40
codegen_flags: <defaults>
</compile_context>

<pallas_src>
import jax
import jax.numpy as jnp
import numpy as np
from jax.experimental import pallas as pl
from jax.experimental.pallas import tpu as pltpu

_LN_EPS = 1e-5


def _round_up(x, m):
    return int((int(x) + m - 1) // m) * m


def _physical_vmem_bytes():
    try:
        return max(int(pltpu.get_tpu_info().vmem_capacity_bytes), 32 * 1024 * 1024)
    except Exception:
        return 64 * 1024 * 1024  # conservative (v7x per-TC VMEM)


def _make_fused_kernel(num_layers, num_rels, d_real, n_pad, pack, compute_dtype):
    """All layers & relations fused; every operand stays resident in VMEM."""
    inv_d = 1.0 / float(d_real)

    def kernel(ab_ref, h0_ref, a_ref, w_ref, b_ref, aw_ref, g_ref, be_ref, m_ref, out_ref):
        ab = ab_ref[0]                      # scalar attention bias (SMEM)
        aw = aw_ref[...]                    # (1, Dp)  attention weight (zero-padded)
        mask = m_ref[...]                   # (1, Dp)  1.0 on real feature lanes
        h0 = h0_ref[...]                    # (Np, Dp) initial features (padded = 0)
        h = h0
        # L is small -> static unroll.
        # TODO(synk): switch to lax.fori_loop with dynamic w/b/gamma/beta indexing if L
        # grows beyond ~4 (bounds vreg live ranges per layer).
        for i in range(num_layers):
            hc = h.astype(compute_dtype)
            # Stage 1: all relations in ONE matmul; A pre-flattened to (R*Np, Np).
            big = jnp.dot(a_ref[...], hc,
                          preferred_element_type=jnp.float32)      # (R*Np, Dp) f32
            if pack:
                # Pack the R real D-lane blocks into one lane-dense tile (tight K = Dp).
                packed = big[0:n_pad, :]
                for r in range(1, num_rels):
                    packed = packed + pltpu.roll(
                        big[r * n_pad:(r + 1) * n_pad, :], shift=r * d_real, axis=1)
                h_conv = jnp.dot(packed.astype(compute_dtype), w_ref[i],
                                 preferred_element_type=jnp.float32) + b_ref[i]
            else:
                # Fallback (R*D > Dp): per-relation accumulation (MRB-friendly on v7x).
                h_conv = b_ref[i]
                for r in range(num_rels):
                    h_conv = h_conv + jnp.dot(
                        big[r * n_pad:(r + 1) * n_pad, :].astype(compute_dtype),
                        w_ref[i, r], preferred_element_type=jnp.float32)
            # AttentionLayer: sigmoid(Linear(D->1)(h_conv)) * h_conv
            attn = jax.nn.sigmoid(jnp.sum(h_conv * aw, axis=-1, keepdims=True) + ab)
            # residual
            h_new = h + attn * h_conv
            # LayerNorm over the real D features (masked two-pass variance).
            mean = jnp.sum(h_new, axis=-1, keepdims=True) * inv_d
            cent = (h_new - mean) * mask
            var = jnp.sum(cent * cent, axis=-1, keepdims=True) * inv_d
            h_ln = cent * jax.lax.rsqrt(var + _LN_EPS) * g_ref[i] + be_ref[i]
            h = jnp.maximum(h_ln, 0.0)      # ReLU (padded lanes stay exactly 0)
        out_ref[...] = h + h0               # final residual to the initial embedding

    return kernel


def _make_layer_kernel(num_rels, d_real, pack, compute_dtype):
    """One layer, gridded: grid = (dst tile 'parallel', src-K tile 'arbitrary')."""
    inv_d = 1.0 / float(d_real)

    def kernel(ab_ref, a_ref, hsrc_ref, hres_ref, w_ref, b_ref, aw_ref, g_ref, be_ref,
               m_ref, out_ref, acc_ref):
        k = pl.program_id(1)

        @pl.when(k == 0)
        def _():
            acc_ref[...] = jnp.zeros_like(acc_ref)

        hc = hsrc_ref[...].astype(compute_dtype)               # (tk, Dp)
        for r in range(num_rels):                              # A_r tile @ h tile
            acc_ref[r] += jnp.dot(a_ref[r], hc, preferred_element_type=jnp.float32)

        @pl.when(k == pl.num_programs(1) - 1)
        def _():
            if pack:
                packed = acc_ref[0]
                for r in range(1, num_rels):
                    packed = packed + pltpu.roll(acc_ref[r], shift=r * d_real, axis=1)
                h_conv = jnp.dot(packed.astype(compute_dtype), w_ref[...],
                                 preferred_element_type=jnp.float32) + b_ref[...]
            else:
                h_conv = b_ref[...]
                for r in range(num_rels):
                    h_conv = h_conv + jnp.dot(acc_ref[r].astype(compute_dtype), w_ref[r],
                                              preferred_element_type=jnp.float32)
            attn = jax.nn.sigmoid(
                jnp.sum(h_conv * aw_ref[...], axis=-1, keepdims=True) + ab_ref[...])
            h_new = hres_ref[...] + attn * h_conv
            mean = jnp.sum(h_new, axis=-1, keepdims=True) * inv_d
            cent = (h_new - mean) * m_ref[...]
            var = jnp.sum(cent * cent, axis=-1, keepdims=True) * inv_d
            out_ref[...] = jnp.maximum(
                cent * jax.lax.rsqrt(var + _LN_EPS) * g_ref[...] + be_ref[...], 0.0)

    return kernel


def improved_rgcn_forward(embed, a_norm, Ws, bs, aw, ab, gammas, betas, *,
                          compute_dtype=jnp.bfloat16, force_grid=False,
                          tile_m=128, tile_k=128):
    """Forward pass. embed:[N,D], a_norm:[R,N,N] (dst,src), Ws:[L,R,D,D], bs:[L,R,D]."""
    N, D = embed.shape
    L, R = int(Ws.shape[0]), int(Ws.shape[1])
    Np = _round_up(N, 128)                  # full MXU K tiles + bf16 sublane packing
    Dp = _round_up(D, 128)                  # lane-dense feature dim
    pack = (R * D) <= Dp                    # relation-packed K fits one lane-tile set
    cdt = jnp.dtype(compute_dtype)
    cbytes = cdt.itemsize

    # Zero-pad everything; padded feature lanes / node rows stay harmless end-to-end
    # (padded src columns of A are zero, gamma/beta/aw/W are zero-padded, output sliced).
    h0 = jnp.pad(embed, ((0, Np - N), (0, Dp - D))).astype(jnp.float32)
    a_p = jnp.pad(a_norm, ((0, 0), (0, Np - N), (0, Np - N))).astype(compute_dtype)
    if pack:
        # Relation-stacked weight with TIGHT K: row r*D + j holds W_r[j, :].
        w_l = jnp.pad(Ws.reshape(L, R * D, D), ((0, 0), (0, Dp - R * D), (0, Dp - D)))
    else:
        w_l = jnp.pad(Ws, ((0, 0), (0, 0), (0, Dp - D), (0, Dp - D)))
    w_l = w_l.astype(compute_dtype)
    b_sum = jnp.pad(bs.sum(axis=1), ((0, 0), (0, Dp - D))).reshape(L, 1, Dp).astype(jnp.float32)
    aw_p = jnp.pad(aw, (0, Dp - D)).reshape(1, Dp).astype(jnp.float32)
    g_p = jnp.pad(gammas, ((0, 0), (0, Dp - D))).reshape(L, 1, Dp).astype(jnp.float32)
    be_p = jnp.pad(betas, ((0, 0), (0, Dp - D))).reshape(L, 1, Dp).astype(jnp.float32)
    mask = (jnp.arange(Dp) < D).astype(jnp.float32).reshape(1, Dp)
    ab_s = jnp.reshape(ab, (1,)).astype(jnp.float32)

    n_w_mats = 1 if pack else R
    flops_layer = 2 * R * Np * Np * Dp + 2 * Np * Dp * Dp * n_w_mats
    a_bytes = R * Np * Np * cbytes
    w_bytes = int(np.prod(w_l.shape)) * cbytes
    param_bytes = (4 * L + 2) * Dp * 4

    phys_vmem = _physical_vmem_bytes()
    fused_bytes = (a_bytes + w_bytes + param_bytes
                   + 2 * Np * Dp * 4          # h0 + out
                   + R * Np * Dp * 4          # stage-1 result
                   + 6 * Np * Dp * 4)         # epilogue temporaries headroom
    use_grid = bool(force_grid) or fused_bytes > int(0.7 * phys_vmem)

    smem = pl.BlockSpec(memory_space=pltpu.MemorySpace.SMEM)
    vmem = pl.BlockSpec(memory_space=pltpu.MemorySpace.VMEM)

    if not use_grid:
        # ---- Fully fused: one pallas_call, no grid; everything resident in VMEM ----
        vmem_lim = int(min(max(2 * fused_bytes + (8 << 20), 32 << 20),
                           phys_vmem - (8 << 20)))
        out = pl.pallas_call(
            _make_fused_kernel(L, R, D, Np, pack, compute_dtype),
            out_shape=jax.ShapeDtypeStruct((Np, Dp), jnp.float32),
            in_specs=[smem] + [vmem] * 8,
            out_specs=vmem,
            compiler_params=pltpu.CompilerParams(vmem_limit_bytes=vmem_lim),
            cost_estimate=pl.CostEstimate(
                flops=int(L * flops_layer),
                transcendentals=int(2 * L * Np),
                bytes_accessed=int(fused_bytes)),
        )(ab_s, h0, a_p.reshape(R * Np, Np), w_l, b_sum, aw_p, g_p, be_p, mask)
        return out[:N, :D]

    # ---- Gridded per-layer fallback: stream A in (R, tm, tk) tiles ------------------
    tm = min(int(tile_m), Np)
    tk = min(int(tile_k), Np)
    grid = (Np // tm, Np // tk)
    ab_2d = ab_s.reshape(1, 1)
    w_i_shape = tuple(w_l.shape[1:])
    nwd = len(w_i_shape)

    tile_bytes = (2 * R * tm * tk * cbytes          # A blocks (double buffered)
                  + 2 * (tm + tk) * Dp * 4          # h residual + h source blocks
                  + 2 * tm * Dp * 4                 # output blocks
                  + R * tm * Dp * 4                 # accumulator scratch
                  + w_bytes // L + param_bytes)
    vmem_lim = int(min(max(2 * tile_bytes + (16 << 20), 32 << 20), phys_vmem - (8 << 20)))

    layer = pl.pallas_call(
        _make_layer_kernel(R, D, pack, compute_dtype),
        out_shape=jax.ShapeDtypeStruct((Np, Dp), jnp.float32),
        grid_spec=pltpu.PrefetchScalarGridSpec(
            num_scalar_prefetch=0,
            grid=grid,
            in_specs=[
                pl.BlockSpec((1, 1), lambda i, k: (0, 0)),            # attention bias
                pl.BlockSpec((R, tm, tk), lambda i, k: (0, i, k)),    # A tile
                pl.BlockSpec((tk, Dp), lambda i, k: (k, 0)),          # h (agg source)
                pl.BlockSpec((tm, Dp), lambda i, k: (i, 0)),          # h (residual)
                pl.BlockSpec(w_i_shape, lambda i, k: (0,) * nwd),     # W (whole)
                pl.BlockSpec((1, Dp), lambda i, k: (0, 0)),           # bias sum
                pl.BlockSpec((1, Dp), lambda i, k: (0, 0)),           # attention weight
                pl.BlockSpec((1, Dp), lambda i, k: (0, 0)),           # gamma
                pl.BlockSpec((1, Dp), lambda i, k: (0, 0)),           # beta
                pl.BlockSpec((1, Dp), lambda i, k: (0, 0)),           # feature mask
            ],
            out_specs=pl.BlockSpec((tm, Dp), lambda i, k: (i, 0)),
            scratch_shapes=[pltpu.VMEM((R, tm, Dp), jnp.float32)],
        ),
        compiler_params=pltpu.CompilerParams(
            dimension_semantics=("parallel", "arbitrary"),
            vmem_limit_bytes=vmem_lim),
        cost_estimate=pl.CostEstimate(
            flops=int(flops_layer),
            transcendentals=int(2 * Np),
            bytes_accessed=int(a_bytes + 3 * Np * Dp * 4 + w_bytes // L + param_bytes)),
    )

    h = h0
    for i in range(L):
        h = layer(ab_2d, a_p, h, h, w_l[i], b_sum[i], aw_p, g_p[i], be_p[i], mask)
    return (h + h0)[:N, :D]


def reference_forward(embed, a_norm, Ws, bs, aw, ab, gammas, betas):
    """Pure-JAX reference with the original module's semantics (f32 throughout)."""
    h = embed
    h0 = h
    for i in range(Ws.shape[0]):
        conv = jnp.einsum('rij,jd->rid', a_norm, h)
        conv = jnp.einsum('rid,rde->rie', conv, Ws[i]) + bs[i][:, None, :]
        h_conv = conv.sum(axis=0)
        attn = jax.nn.sigmoid(h_conv @ aw[:, None] + ab)          # [N, 1]
        h = h + attn * h_conv
        mean = h.mean(axis=-1, keepdims=True)
        var = jnp.square(h - mean).mean(axis=-1, keepdims=True)
        h = (h - mean) / jnp.sqrt(var + _LN_EPS) * gammas[i] + betas[i]
        h = jnp.maximum(h, 0.0)
    return h + h0


if __name__ == "__main__":
    def build_inputs(key, N, D, R, L):
        k_embed, k_adj, k_w, k_aw, k_ab = jax.random.split(key, 5)
        # Embedding table (== embed(arange(N))): xavier_uniform_
        lim_e = float(np.sqrt(6.0 / (N + D)))
        embed = jax.random.uniform(k_embed, (N, D), jnp.float32, -lim_e, lim_e)
        # Synthetic graph: dense per-relation adjacency A[r, dst, src] with self-loops,
        # degree-normalized as D_in^-1/2 A D_out^-1/2 (dgl.GraphConv(norm='both')).
        adj = (jax.random.uniform(k_adj, (R, N, N)) < 0.15).astype(jnp.float32)
        adj = jnp.maximum(adj, jnp.eye(N, dtype=jnp.float32)[None])
        d_in = adj.sum(axis=2)
        d_out = adj.sum(axis=1)
        norm_in = jnp.where(d_in > 0, jax.lax.rsqrt(d_in), 0.0)
        norm_out = jnp.where(d_out > 0, jax.lax.rsqrt(d_out), 0.0)
        a_norm = norm_in[:, :, None] * adj * norm_out[:, None, :]
        # GraphConv weights (xavier_uniform_) and biases (zeros), per layer / relation
        lim_w = float(np.sqrt(6.0 / (D + D)))
        Ws = jax.random.uniform(k_w, (L, R, D, D), jnp.float32, -lim_w, lim_w)
        bs = jnp.zeros((L, R, D), jnp.float32)
        # AttentionLayer fc = nn.Linear(D, 1): default U(-1/sqrt(D), 1/sqrt(D)) init
        lim_a = float(1.0 / np.sqrt(D))
        aw = jax.random.uniform(k_aw, (D,), jnp.float32, -lim_a, lim_a)
        ab = jax.random.uniform(k_ab, (), jnp.float32, -lim_a, lim_a)
        # LayerNorm params (PyTorch default init)
        gammas = jnp.ones((L, D), jnp.float32)
        betas = jnp.zeros((L, D), jnp.float32)
        return embed, a_norm, Ws, bs, aw, ab, gammas, betas

    fwd = jax.jit(improved_rgcn_forward,
                  static_argnames=("compute_dtype", "force_grid", "tile_m", "tile_k"))

    # --- Small graph: fully-fused single-call path -----------------------------------
    args = build_inputs(jax.random.PRNGKey(0), N=64, D=32, R=3, L=2)
    ref = reference_forward(*args)

    out_f32 = jax.block_until_ready(fwd(*args, compute_dtype=jnp.float32))
    np.testing.assert_allclose(np.asarray(out_f32), np.asarray(ref),
                               rtol=1e-4, atol=1e-4)

    out_bf16 = jax.block_until_ready(fwd(*args, compute_dtype=jnp.bfloat16))
    np.testing.assert_allclose(np.asarray(out_bf16), np.asarray(ref),
                               rtol=5e-2, atol=5e-2)

    # --- Larger graph: gridded per-layer fallback (forced here to validate it) -------
    args_big = build_inputs(jax.random.PRNGKey(1), N=300, D=32, R=3, L=2)
    ref_big = reference_forward(*args_big)
    out_grid = jax.block_until_ready(
        fwd(*args_big, compute_dtype=jnp.float32, force_grid=True))
    np.testing.assert_allclose(np.asarray(out_grid), np.asarray(ref_big),
                               rtol=1e-4, atol=1e-4)

    print("KERNEL_OK")
</pallas_src>

<mosaic_0001>
module attributes {stable_mosaic.version = 11 : i64} {
  func.func @kernel(%arg0: memref<1xf32, #tpu.memory_space<smem>>, %arg1: memref<128x128xf32, #tpu.memory_space<vmem>>, %arg2: memref<384x128xf32, #tpu.memory_space<vmem>>, %arg3: memref<2x128x128xf32, #tpu.memory_space<vmem>>, %arg4: memref<2x1x128xf32, #tpu.memory_space<vmem>>, %arg5: memref<1x128xf32, #tpu.memory_space<vmem>>, %arg6: memref<2x1x128xf32, #tpu.memory_space<vmem>>, %arg7: memref<2x1x128xf32, #tpu.memory_space<vmem>>, %arg8: memref<1x128xf32, #tpu.memory_space<vmem>>, %arg9: memref<128x128xf32, #tpu.memory_space<vmem>>) attributes {dimension_semantics = [], scalar_prefetch = 0 : i64, scratch_operands = 0 : i64, tpu.core_type = #tpu.core_type<tc>} {
    %c0 = arith.constant 0 : index
    %0 = memref.load %arg0[%c0] : memref<1xf32, #tpu.memory_space<smem>>
    %c0_0 = arith.constant 0 : index
    %c0_1 = arith.constant 0 : index
    %1 = vector.load %arg5[%c0_0, %c0_1] : memref<1x128xf32, #tpu.memory_space<vmem>>, vector<1x128xf32>
    %c0_2 = arith.constant 0 : index
    %c0_3 = arith.constant 0 : index
    %2 = vector.load %arg8[%c0_2, %c0_3] : memref<1x128xf32, #tpu.memory_space<vmem>>, vector<1x128xf32>
    %c0_4 = arith.constant 0 : index
    %c0_5 = arith.constant 0 : index
    %3 = vector.load %arg1[%c0_4, %c0_5] : memref<128x128xf32, #tpu.memory_space<vmem>>, vector<128x128xf32>
    %c0_6 = arith.constant 0 : index
    %c0_7 = arith.constant 0 : index
    %4 = vector.load %arg2[%c0_6, %c0_7] : memref<384x128xf32, #tpu.memory_space<vmem>>, vector<384x128xf32>
    %cst = arith.constant dense<0.000000e+00> : vector<384x128xf32>
    %5 = tpu.matmul %4, %3, %cst {dimension_numbers = #tpu.dot_dimension_numbers<[1], [0], [0], [1], [0, 0, 1, 1], [], []>} : vector<384x128xf32>, vector<128x128xf32>, vector<384x128xf32> -> vector<384x128xf32>
    %6 = vector.extract_strided_slice %5 {offsets = [0, 0], sizes = [128, 128], strides = [1, 1]} : vector<384x128xf32> to vector<128x128xf32>
    %7 = vector.extract_strided_slice %5 {offsets = [128, 0], sizes = [128, 128], strides = [1, 1]} : vector<384x128xf32> to vector<128x128xf32>
    %c32_i32 = arith.constant 32 : i32
    %8 = tpu.dynamic_rotate %7 by %c32_i32 dim 1 : vector<128x128xf32>, i32 -> vector<128x128xf32>
    %9 = arith.addf %6, %8 : vector<128x128xf32>
    %10 = vector.extract_strided_slice %5 {offsets = [256, 0], sizes = [128, 128], strides = [1, 1]} : vector<384x128xf32> to vector<128x128xf32>
    %c64_i32 = arith.constant 64 : i32
    %11 = tpu.dynamic_rotate %10 by %c64_i32 dim 1 : vector<128x128xf32>, i32 -> vector<128x128xf32>
    %12 = arith.addf %9, %11 : vector<128x128xf32>
    %c0_8 = arith.constant 0 : index
    %c0_9 = arith.constant 0 : index
    %c0_10 = arith.constant 0 : index
    %13 = vector.load %arg3[%c0_8, %c0_9, %c0_10] : memref<2x128x128xf32, #tpu.memory_space<vmem>>, vector<1x128x128xf32>
    %14 = vector.shape_cast %13 : vector<1x128x128xf32> to vector<128x128xf32>
    %cst_11 = arith.constant dense<0.000000e+00> : vector<128x128xf32>
    %15 = tpu.matmul %12, %14, %cst_11 {dimension_numbers = #tpu.dot_dimension_numbers<[1], [0], [0], [1], [0, 0, 1, 1], [], []>} : vector<128x128xf32>, vector<128x128xf32>, vector<128x128xf32> -> vector<128x128xf32>
    %c0_12 = arith.constant 0 : index
    %c0_13 = arith.constant 0 : index
    %c0_14 = arith.constant 0 : index
    %16 = vector.load %arg4[%c0_12, %c0_13, %c0_14] : memref<2x1x128xf32, #tpu.memory_space<vmem>>, vector<1x1x128xf32>
    %17 = vector.shape_cast %16 : vector<1x1x128xf32> to vector<1x128xf32>
    %18 = vector.broadcast %17 : vector<1x128xf32> to vector<128x128xf32>
    %19 = arith.addf %15, %18 : vector<128x128xf32>
    %20 = vector.broadcast %1 : vector<1x128xf32> to vector<128x128xf32>
    %21 = arith.mulf %19, %20 : vector<128x128xf32>
    %cst_15 = arith.constant dense<0.000000e+00> : vector<128xf32>
    %22 = vector.multi_reduction <add>, %21, %cst_15 [1] : vector<128x128xf32> to vector<128xf32>
    %23 = vector.shape_cast %22 : vector<128xf32> to vector<128x1xf32>
    %24 = vector.broadcast %0 : f32 to vector<128x1xf32>
    %25 = arith.addf %23, %24 : vector<128x1xf32>
    %26 = arith.negf %25 : vector<128x1xf32>
    %27 = math.exp %26 : vector<128x1xf32>
    %cst_16 = arith.constant 1.000000e+00 : f32
    %28 = vector.broadcast %cst_16 : f32 to vector<128x1xf32>
    %29 = arith.addf %28, %27 : vector<128x1xf32>
    %30 = arith.divf %28, %29 : vector<128x1xf32>
    %31 = vector.broadcast %30 : vector<128x1xf32> to vector<128x128xf32>
    %32 = arith.mulf %31, %19 : vector<128x128xf32>
    %33 = arith.addf %3, %32 : vector<128x128xf32>
    %cst_17 = arith.constant dense<0.000000e+00> : vector<128xf32>
    %34 = vector.multi_reduction <add>, %33, %cst_17 [1] : vector<128x128xf32> to vector<128xf32>
    %35 = vector.shape_cast %34 : vector<128xf32> to vector<128x1xf32>
    %cst_18 = arith.constant 3.125000e-02 : f32
    %36 = vector.broadcast %cst_18 : f32 to vector<128x1xf32>
    %37 = arith.mulf %35, %36 : vector<128x1xf32>
    %38 = vector.broadcast %37 : vector<128x1xf32> to vector<128x128xf32>
    %39 = arith.subf %33, %38 : vector<128x128xf32>
    %40 = vector.broadcast %2 : vector<1x128xf32> to vector<128x128xf32>
    %41 = arith.mulf %39, %40 : vector<128x128xf32>
    %42 = arith.mulf %41, %41 : vector<128x128xf32>
    %cst_19 = arith.constant dense<0.000000e+00> : vector<128xf32>
    %43 = vector.multi_reduction <add>, %42, %cst_19 [1] : vector<128x128xf32> to vector<128xf32>
    %44 = vector.shape_cast %43 : vector<128xf32> to vector<128x1xf32>
    %cst_20 = arith.constant 3.125000e-02 : f32
    %45 = vector.broadcast %cst_20 : f32 to vector<128x1xf32>
    %46 = arith.mulf %44, %45 : vector<128x1xf32>
    %cst_21 = arith.constant 9.99999974E-6 : f32
    %47 = vector.broadcast %cst_21 : f32 to vector<128x1xf32>
    %48 = arith.addf %46, %47 : vector<128x1xf32>
    %49 = math.rsqrt %48 : vector<128x1xf32>
    %50 = vector.broadcast %49 : vector<128x1xf32> to vector<128x128xf32>
    %51 = arith.mulf %41, %50 : vector<128x128xf32>
    %c0_22 = arith.constant 0 : index
    %c0_23 = arith.constant 0 : index
    %c0_24 = arith.constant 0 : index
    %52 = vector.load %arg6[%c0_22, %c0_23, %c0_24] : memref<2x1x128xf32, #tpu.memory_space<vmem>>, vector<1x1x128xf32>
    %53 = vector.shape_cast %52 : vector<1x1x128xf32> to vector<1x128xf32>
    %54 = vector.broadcast %53 : vector<1x128xf32> to vector<128x128xf32>
    %55 = arith.mulf %51, %54 : vector<128x128xf32>
    %c0_25 = arith.constant 0 : index
    %c0_26 = arith.constant 0 : index
    %c0_27 = arith.constant 0 : index
    %56 = vector.load %arg7[%c0_25, %c0_26, %c0_27] : memref<2x1x128xf32, #tpu.memory_space<vmem>>, vector<1x1x128xf32>
    %57 = vector.shape_cast %56 : vector<1x1x128xf32> to vector<1x128xf32>
    %58 = vector.broadcast %57 : vector<1x128xf32> to vector<128x128xf32>
    %59 = arith.addf %55, %58 : vector<128x128xf32>
    %cst_28 = arith.constant 0.000000e+00 : f32
    %60 = vector.broadcast %cst_28 : f32 to vector<128x128xf32>
    %61 = arith.maximumf %59, %60 : vector<128x128xf32>
    %c0_29 = arith.constant 0 : index
    %c0_30 = arith.constant 0 : index
    %62 = vector.load %arg2[%c0_29, %c0_30] : memref<384x128xf32, #tpu.memory_space<vmem>>, vector<384x128xf32>
    %cst_31 = arith.constant dense<0.000000e+00> : vector<384x128xf32>
    %63 = tpu.matmul %62, %61, %cst_31 {dimension_numbers = #tpu.dot_dimension_numbers<[1], [0], [0], [1], [0, 0, 1, 1], [], []>} : vector<384x128xf32>, vector<128x128xf32>, vector<384x128xf32> -> vector<384x128xf32>
    %64 = vector.extract_strided_slice %63 {offsets = [0, 0], sizes = [128, 128], strides = [1, 1]} : vector<384x128xf32> to vector<128x128xf32>
    %65 = vector.extract_strided_slice %63 {offsets = [128, 0], sizes = [128, 128], strides = [1, 1]} : vector<384x128xf32> to vector<128x128xf32>
    %c32_i32_32 = arith.constant 32 : i32
    %66 = tpu.dynamic_rotate %65 by %c32_i32_32 dim 1 : vector<128x128xf32>, i32 -> vector<128x128xf32>
    %67 = arith.addf %64, %66 : vector<128x128xf32>
    %68 = vector.extract_strided_slice %63 {offsets = [256, 0], sizes = [128, 128], strides = [1, 1]} : vector<384x128xf32> to vector<128x128xf32>
    %c64_i32_33 = arith.constant 64 : i32
    %69 = tpu.dynamic_rotate %68 by %c64_i32_33 dim 1 : vector<128x128xf32>, i32 -> vector<128x128xf32>
    %70 = arith.addf %67, %69 : vector<128x128xf32>
    %c1 = arith.constant 1 : index
    %c0_34 = arith.constant 0 : index
    %c0_35 = arith.constant 0 : index
    %71 = vector.load %arg3[%c1, %c0_34, %c0_35] : memref<2x128x128xf32, #tpu.memory_space<vmem>>, vector<1x128x128xf32>
    %72 = vector.shape_cast %71 : vector<1x128x128xf32> to vector<128x128xf32>
    %cst_36 = arith.constant dense<0.000000e+00> : vector<128x128xf32>
    %73 = tpu.matmul %70, %72, %cst_36 {dimension_numbers = #tpu.dot_dimension_numbers<[1], [0], [0], [1], [0, 0, 1, 1], [], []>} : vector<128x128xf32>, vector<128x128xf32>, vector<128x128xf32> -> vector<128x128xf32>
    %c1_37 = arith.constant 1 : index
    %c0_38 = arith.constant 0 : index
    %c0_39 = arith.constant 0 : index
    %74 = vector.load %arg4[%c1_37, %c0_38, %c0_39] : memref<2x1x128xf32, #tpu.memory_space<vmem>>, vector<1x1x128xf32>
    %75 = vector.shape_cast %74 : vector<1x1x128xf32> to vector<1x128xf32>
    %76 = vector.broadcast %75 : vector<1x128xf32> to vector<128x128xf32>
    %77 = arith.addf %73, %76 : vector<128x128xf32>
    %78 = vector.broadcast %1 : vector<1x128xf32> to vector<128x128xf32>
    %79 = arith.mulf %77, %78 : vector<128x128xf32>
    %cst_40 = arith.constant dense<0.000000e+00> : vector<128xf32>
    %80 = vector.multi_reduction <add>, %79, %cst_40 [1] : vector<128x128xf32> to vector<128xf32>
    %81 = vector.shape_cast %80 : vector<128xf32> to vector<128x1xf32>
    %82 = vector.broadcast %0 : f32 to vector<128x1xf32>
    %83 = arith.addf %81, %82 : vector<128x1xf32>
    %84 = arith.negf %83 : vector<128x1xf32>
    %85 = math.exp %84 : vector<128x1xf32>
    %cst_41 = arith.constant 1.000000e+00 : f32
    %86 = vector.broadcast %cst_41 : f32 to vector<128x1xf32>
    %87 = arith.addf %86, %85 : vector<128x1xf32>
    %88 = arith.divf %86, %87 : vector<128x1xf32>
    %89 = vector.broadcast %88 : vector<128x1xf32> to vector<128x128xf32>
    %90 = arith.mulf %89, %77 : vector<128x128xf32>
    %91 = arith.addf %61, %90 : vector<128x128xf32>
    %cst_42 = arith.constant dense<0.000000e+00> : vector<128xf32>
    %92 = vector.multi_reduction <add>, %91, %cst_42 [1] : vector<128x128xf32> to vector<128xf32>
    %93 = vector.shape_cast %92 : vector<128xf32> to vector<128x1xf32>
    %cst_43 = arith.constant 3.125000e-02 : f32
    %94 = vector.broadcast %cst_43 : f32 to vector<128x1xf32>
    %95 = arith.mulf %93, %94 : vector<128x1xf32>
    %96 = vector.broadcast %95 : vector<128x1xf32> to vector<128x128xf32>
    %97 = arith.subf %91, %96 : vector<128x128xf32>
    %98 = vector.broadcast %2 : vector<1x128xf32> to vector<128x128xf32>
    %99 = arith.mulf %97, %98 : vector<128x128xf32>
    %100 = arith.mulf %99, %99 : vector<128x128xf32>
    %cst_44 = arith.constant dense<0.000000e+00> : vector<128xf32>
    %101 = vector.multi_reduction <add>, %100, %cst_44 [1] : vector<128x128xf32> to vector<128xf32>
    %102 = vector.shape_cast %101 : vector<128xf32> to vector<128x1xf32>
    %cst_45 = arith.constant 3.125000e-02 : f32
    %103 = vector.broadcast %cst_45 : f32 to vector<128x1xf32>
    %104 = arith.mulf %102, %103 : vector<128x1xf32>
    %cst_46 = arith.constant 9.99999974E-6 : f32
    %105 = vector.broadcast %cst_46 : f32 to vector<128x1xf32>
    %106 = arith.addf %104, %105 : vector<128x1xf32>
    %107 = math.rsqrt %106 : vector<128x1xf32>
    %108 = vector.broadcast %107 : vector<128x1xf32> to vector<128x128xf32>
    %109 = arith.mulf %99, %108 : vector<128x128xf32>
    %c1_47 = arith.constant 1 : index
    %c0_48 = arith.constant 0 : index
    %c0_49 = arith.constant 0 : index
    %110 = vector.load %arg6[%c1_47, %c0_48, %c0_49] : memref<2x1x128xf32, #tpu.memory_space<vmem>>, vector<1x1x128xf32>
    %111 = vector.shape_cast %110 : vector<1x1x128xf32> to vector<1x128xf32>
    %112 = vector.broadcast %111 : vector<1x128xf32> to vector<128x128xf32>
    %113 = arith.mulf %109, %112 : vector<128x128xf32>
    %c1_50 = arith.constant 1 : index
    %c0_51 = arith.constant 0 : index
    %c0_52 = arith.constant 0 : index
    %114 = vector.load %arg7[%c1_50, %c0_51, %c0_52] : memref<2x1x128xf32, #tpu.memory_space<vmem>>, vector<1x1x128xf32>
    %115 = vector.shape_cast %114 : vector<1x1x128xf32> to vector<1x128xf32>
    %116 = vector.broadcast %115 : vector<1x128xf32> to vector<128x128xf32>
    %117 = arith.addf %113, %116 : vector<128x128xf32>
    %cst_53 = arith.constant 0.000000e+00 : f32
    %118 = vector.broadcast %cst_53 : f32 to vector<128x128xf32>
    %119 = arith.maximumf %117, %118 : vector<128x128xf32>
    %120 = arith.addf %119, %3 : vector<128x128xf32>
    %c0_54 = arith.constant 0 : index
    %c0_55 = arith.constant 0 : index
    %121 = vector.load %arg9[%c0_54, %c0_55] : memref<128x128xf32, #tpu.memory_space<vmem>>, vector<128x128xf32>
    tpu.vector_store %arg9[%c0_54, %c0_55], %120 {strides = array<i32>} : memref<128x128xf32, #tpu.memory_space<vmem>>, vector<128x128xf32>,
    return
  }
}

</mosaic_0001>

<llo_original>
// kernel: improved_rgcn_forward.1
$region0: #{improved_rgcn_forward.1}
  #allocation0 [shape = 'u32[]', space=smem, size = 0x4, offset = 0x4, fixed_abs, tag = 'smem constant byte address 0x4 - core index']
  #allocation1 [shape = 'u32[144,128]{1,0:T(1,128)}', space=vmem, size = 0x12000, scoped, tag = 'internal scratch']
  #allocation2 [shape = 'f32[1]{0:T(128)S(6)}', space=smem, size = 0x200, scoped, tag = 'scoped memory for improved_rgcn_forward.1']
  %s0 = inlined_call_operand.<no memory space> [shape: f32[1], index: 0, kind: input, shape index: {}]
  %s1 = inlined_call_operand.vmem [shape: f32[128,128], index: 1, kind: input, shape index: {}]
  %s2 = inlined_call_operand.vmem [shape: f32[384,128], index: 2, kind: input, shape index: {}]
  %s3 = inlined_call_operand.vmem [shape: f32[2,128,128], index: 3, kind: input, shape index: {}]
  %s4 = inlined_call_operand.vmem [shape: f32[2,1,128], index: 4, kind: input, shape index: {}]
  %s5 = inlined_call_operand.vmem [shape: f32[1,128], index: 5, kind: input, shape index: {}]
  %s6 = inlined_call_operand.vmem [shape: f32[2,1,128], index: 6, kind: input, shape index: {}]
  %s7 = inlined_call_operand.vmem [shape: f32[2,1,128], index: 7, kind: input, shape index: {}]
  %s8 = inlined_call_operand.vmem [shape: f32[1,128], index: 8, kind: input, shape index: {}]
  %s9 = inlined_call_operand.vmem [shape: f32[128,128], index: 9, kind: output, shape index: {}]
  %s10 = sld [smem:[#allocation0]]
  $region46: #{improved_rgcn_forward.1} parent=0
    _
  %s12 = ssub.s32 1, %s10
  %s13 = scalar_select 0, %s12, %s10
  %14 = sst [smem:[#allocation2]] %s0
  // Predicated region
  $region2: #{improved_rgcn_forward.1} parent=0 // pred_check
    _
  $region3: #{improved_rgcn_forward.1} parent=0 // pred_check_branch
    %16 = sbr.rel (0) target = $region5
  $region4: #{improved_rgcn_forward.1} parent=0 // pred_region
    _
  $region5: #{improved_rgcn_forward.1} parent=0 // pred_fallthru
    _
  // Predicated region
  $region6: #{improved_rgcn_forward.1} parent=0 // pred_check
    _
  $region7: #{improved_rgcn_forward.1} parent=0 // pred_check_branch
    %18 = sbr.rel (0) target = $region9
  $region8: #{improved_rgcn_forward.1} parent=0 // pred_region
    _
  $region9: #{improved_rgcn_forward.1} parent=0 // pred_fallthru
    _
  // Predicated region
  $region10: #{improved_rgcn_forward.1} parent=0 // pred_check
    _
  $region11: #{improved_rgcn_forward.1} parent=0 // pred_check_branch
    %20 = sbr.rel (0) target = $region13
  $region12: #{improved_rgcn_forward.1} parent=0 // pred_region
    _
  $region13: #{improved_rgcn_forward.1} parent=0 // pred_fallthru
    _
  // Predicated region
  $region14: #{improved_rgcn_forward.1} parent=0 // pred_check
    _
  $region15: #{improved_rgcn_forward.1} parent=0 // pred_check_branch
    %22 = sbr.rel (0) target = $region17
  $region16: #{improved_rgcn_forward.1} parent=0 // pred_region
    _
  $region17: #{improved_rgcn_forward.1} parent=0 // pred_fallthru
    _
  // Predicated region
  $region18: #{improved_rgcn_forward.1} parent=0 // pred_check
    _
  $region19: #{improved_rgcn_forward.1} parent=0 // pred_check_branch
    %24 = sbr.rel (0) target = $region21
  $region20: #{improved_rgcn_forward.1} parent=0 // pred_region
    _
  $region21: #{improved_rgcn_forward.1} parent=0 // pred_fallthru
    _
  // Predicated region
  $region22: #{improved_rgcn_forward.1} parent=0 // pred_check
    _
  $region23: #{improved_rgcn_forward.1} parent=0 // pred_check_branch
    %26 = sbr.rel (0) target = $region25
  $region24: #{improved_rgcn_forward.1} parent=0 // pred_region
    _
  $region25: #{improved_rgcn_forward.1} parent=0 // pred_fallthru
    _
  // Predicated region
  $region26: #{improved_rgcn_forward.1} parent=0 // pred_check
    _
  $region27: #{improved_rgcn_forward.1} parent=0 // pred_check_branch
    %28 = sbr.rel (0) target = $region29
  $region28: #{improved_rgcn_forward.1} parent=0 // pred_region
    _
  $region29: #{improved_rgcn_forward.1} parent=0 // pred_fallthru
    _
  // Predicated region
  $region30: #{improved_rgcn_forward.1} parent=0 // pred_check
    _
  $region31: #{improved_rgcn_forward.1} parent=0 // pred_check_branch
    %30 = sbr.rel (0) target = $region33
  $region32: #{improved_rgcn_forward.1} parent=0 // pred_region
    _
  $region33: #{improved_rgcn_forward.1} parent=0 // pred_fallthru
    _
  // Predicated region
  $region34: #{improved_rgcn_forward.1} parent=0 // pred_check
    _
  $region35: #{improved_rgcn_forward.1} parent=0 // pred_check_branch
    %32 = sbr.rel (0) target = $region37
  $region36: #{improved_rgcn_forward.1} parent=0 // pred_region
    _
  $region37: #{improved_rgcn_forward.1} parent=0 // pred_fallthru
    _
  %s33 = sld [smem:[#allocation2]]
  %v34 = vld [vmem:[%s5] sm:$0x1]
  %v35 = vld [vmem:[%s8] sm:$0x1]
  %v36 = vld [vmem:[%s1] sm:$0xff]
  %v37 = vld [vmem:[%s1 + $0x8] sm:$0xff]
  %v38 = vld [vmem:[%s1 + $0x10] sm:$0xff]
  %v39 = vld [vmem:[%s1 + $0x18] sm:$0xff]
  %v40 = vld [vmem:[%s1 + $0x20] sm:$0xff]
  %v41 = vld [vmem:[%s1 + $0x28] sm:$0xff]
  %v42 = vld [vmem:[%s1 + $0x30] sm:$0xff]
  %v43 = vld [vmem:[%s1 + $0x38] sm:$0xff]
  %v44 = vld [vmem:[%s1 + $0x40] sm:$0xff]
  %v45 = vld [vmem:[%s1 + $0x48] sm:$0xff]
  %v46 = vld [vmem:[%s1 + $0x50] sm:$0xff]
  %v47 = vld [vmem:[%s1 + $0x58] sm:$0xff]
  %v48 = vld [vmem:[%s1 + $0x60] sm:$0xff]
  %v49 = vld [vmem:[%s1 + $0x68] sm:$0xff]
  %v50 = vld [vmem:[%s1 + $0x70] sm:$0xff]
  %v51 = vld [vmem:[%s1 + $0x78] sm:$0xff]
  %v52 = vld [vmem:[%s2] sm:$0xff]
  %v53 = vld [vmem:[%s2 + $0x8] sm:$0xff]
  %v54 = vld [vmem:[%s2 + $0x10] sm:$0xff]
  %v55 = vld [vmem:[%s2 + $0x18] sm:$0xff]
  %v56 = vld [vmem:[%s2 + $0x20] sm:$0xff]
  %v57 = vld [vmem:[%s2 + $0x28] sm:$0xff]
  %v58 = vld [vmem:[%s2 + $0x30] sm:$0xff]
  %v59 = vld [vmem:[%s2 + $0x38] sm:$0xff]
  %v60 = vld [vmem:[%s2 + $0x40] sm:$0xff]
  %v61 = vld [vmem:[%s2 + $0x48] sm:$0xff]
  %v62 = vld [vmem:[%s2 + $0x50] sm:$0xff]
  %v63 = vld [vmem:[%s2 + $0x58] sm:$0xff]
  %v64 = vld [vmem:[%s2 + $0x60] sm:$0xff]
  %v65 = vld [vmem:[%s2 + $0x68] sm:$0xff]
  %v66 = vld [vmem:[%s2 + $0x70] sm:$0xff]
  %v67 = vld [vmem:[%s2 + $0x78] sm:$0xff]
  %v68 = vld [vmem:[%s2 + $0x80] sm:$0xff]
  %v69 = vld [vmem:[%s2 + $0x88] sm:$0xff]
  %v70 = vld [vmem:[%s2 + $0x90] sm:$0xff]
  %v71 = vld [vmem:[%s2 + $0x98] sm:$0xff]
  %v72 = vld [vmem:[%s2 + $0xa0] sm:$0xff]
  %v73 = vld [vmem:[%s2 + $0xa8] sm:$0xff]
  %v74 = vld [vmem:[%s2 + $0xb0] sm:$0xff]
  %v75 = vld [vmem:[%s2 + $0xb8] sm:$0xff]
  %v76 = vld [vmem:[%s2 + $0xc0] sm:$0xff]
  %v77 = vld [vmem:[%s2 + $0xc8] sm:$0xff]
  %v78 = vld [vmem:[%s2 + $0xd0] sm:$0xff]
  %v79 = vld [vmem:[%s2 + $0xd8] sm:$0xff]
  %v80 = vld [vmem:[%s2 + $0xe0] sm:$0xff]
  %v81 = vld [vmem:[%s2 + $0xe8] sm:$0xff]
  %v82 = vld [vmem:[%s2 + $0xf0] sm:$0xff]
  %v83 = vld [vmem:[%s2 + $0xf8] sm:$0xff]
  %v84 = vld [vmem:[%s2 + $0x100] sm:$0xff]
  %v85 = vld [vmem:[%s2 + $0x108] sm:$0xff]
  %v86 = vld [vmem:[%s2 + $0x110] sm:$0xff]
  %v87 = vld [vmem:[%s2 + $0x118] sm:$0xff]
  %v88 = vld [vmem:[%s2 + $0x120] sm:$0xff]
  %v89 = vld [vmem:[%s2 + $0x128] sm:$0xff]
  %v90 = vld [vmem:[%s2 + $0x130] sm:$0xff]
  %v91 = vld [vmem:[%s2 + $0x138] sm:$0xff]
  %v92 = vld [vmem:[%s2 + $0x140] sm:$0xff]
  %v93 = vld [vmem:[%s2 + $0x148] sm:$0xff]
  %v94 = vld [vmem:[%s2 + $0x150] sm:$0xff]
  %v95 = vld [vmem:[%s2 + $0x158] sm:$0xff]
  %v96 = vld [vmem:[%s2 + $0x160] sm:$0xff]
  %v97 = vld [vmem:[%s2 + $0x168] sm:$0xff]
  %v98 = vld [vmem:[%s2 + $0x170] sm:$0xff]
  %v99 = vld [vmem:[%s2 + $0x178] sm:$0xff]
  %100 = vmatprep.subr.mxu0 0.0
  %101 = vmatpush1.msra.mxu0 %v51
  %102 = vmatprep.subr.mxu0 0.0
  %103 = vmatpush1.msra.mxu0 %v50
  %104 = vmatprep.subr.mxu0 0.0
  %105 = vmatpush1.msra.mxu0 %v49
  %106 = vmatprep.subr.mxu0 0.0
  %107 = vmatpush1.msra.mxu0 %v48
  %108 = vmatprep.subr.mxu0 0.0
  %109 = vmatpush1.msra.mxu0 %v47
  %110 = vmatprep.subr.mxu0 0.0
  %111 = vmatpush1.msra.mxu0 %v46
  %112 = vmatprep.subr.mxu0 0.0
  %113 = vmatpush1.msra.mxu0 %v45
  %114 = vmatprep.subr.mxu0 0.0
  %115 = vmatpush1.msra.mxu0 %v44
  %116 = vmatprep.subr.mxu0 0.0
  %117 = vmatpush1.msra.mxu0 %v43
  %118 = vmatprep.subr.mxu0 0.0
  %119 = vmatpush1.msra.mxu0 %v42
  %120 = vmatprep.subr.mxu0 0.0
  %121 = vmatpush1.msra.mxu0 %v41
  %122 = vmatprep.subr.mxu0 0.0
  %123 = vmatpush1.msra.mxu0 %v40
  %124 = vmatprep.subr.mxu0 0.0
  %125 = vmatpush1.msra.mxu0 %v39
  %126 = vmatprep.subr.mxu0 0.0
  %127 = vmatpush1.msra.mxu0 %v38
  %128 = vmatprep.subr.mxu0 0.0
  %129 = vmatpush1.msra.mxu0 %v37
  %130 = vmatprep.subr.mxu0 0.0
  %131 = vmatpush1.msra.mxu0 %v36
  %132 = vmatprep.subr.mxu0 0.0
  %133 = vmatpush2.msra.mxu0 0.0
  %134 = vmatprep.subr.mxu0 0.0
  %135 = vmatpush2.msra.mxu0 0.0
  %136 = vmatprep.subr.mxu0 0.0
  %137 = vmatpush2.msra.mxu0 0.0
  %138 = vmatprep.subr.mxu0 0.0
  %139 = vmatpush2.msra.mxu0 0.0
  %140 = vmatprep.subr.mxu0 0.0
  %141 = vmatpush2.msra.mxu0 0.0
  %142 = vmatprep.subr.mxu0 0.0
  %143 = vmatpush2.msra.mxu0 0.0
  %144 = vmatprep.subr.mxu0 0.0
  %145 = vmatpush2.msra.mxu0 0.0
  %146 = vmatprep.subr.mxu0 0.0
  %147 = vmatpush2.msra.mxu0 0.0
  %148 = vmatprep.subr.mxu0 0.0
  %149 = vmatpush2.msra.mxu0 0.0
  %150 = vmatprep.subr.mxu0 0.0
  %151 = vmatpush2.msra.mxu0 0.0
  %152 = vmatprep.subr.mxu0 0.0
  %153 = vmatpush2.msra.mxu0 0.0
  %154 = vmatprep.subr.mxu0 0.0
  %155 = vmatpush2.msra.mxu0 0.0
  %156 = vmatprep.subr.mxu0 0.0
  %157 = vmatpush2.msra.mxu0 0.0
  %158 = vmatprep.subr.mxu0 0.0
  %159 = vmatpush2.msra.mxu0 0.0
  %160 = vmatprep.subr.mxu0 0.0
  %161 = vmatpush2.msra.mxu0 0.0
  %162 = vmatprep.subr.mxu0 0.0
  %163 = vmatpush2.msra.mxu0 0.0
  %164 = vmatprep.mubr.f32.mxu0 0.0
  %165 = vmatmul.mubr.f32.gmra.mxu0 %v52
  %v166 = vpop.f32.mrf.mxu0
  %v167 = vadd.f32 0.0, %v166
  %v168 = vpop.f32.mrf.mxu0
  %169 = vmatprep.mubr.f32.mxu0 0.0
  %170 = vmatmul.mubr.f32.gmra.mxu0 %v53
  %v171 = vpop.f32.mrf.mxu0
  %v172 = vadd.f32 0.0, %v171
  %v173 = vpop.f32.mrf.mxu0
  %174 = vmatprep.mubr.f32.mxu0 0.0
  %175 = vmatmul.mubr.f32.gmra.mxu0 %v54
  %v176 = vpop.f32.mrf.mxu0
  %v177 = vadd.f32 0.0, %v176
  %v178 = vpop.f32.mrf.mxu0
  %179 = vmatprep.mubr.f32.mxu0 0.0
  %180 = vmatmul.mubr.f32.gmra.mxu0 %v55
  %v181 = vpop.f32.mrf.mxu0
  %v182 = vadd.f32 0.0, %v181
  %v183 = vpop.f32.mrf.mxu0
  %184 = vmatprep.mubr.f32.mxu0 0.0
  %185 = vmatmul.mubr.f32.gmra.mxu0 %v56
  %v186 = vpop.f32.mrf.mxu0
  %v187 = vadd.f32 0.0, %v186
  %v188 = vpop.f32.mrf.mxu0
  %189 = vmatprep.mubr.f32.mxu0 0.0
  %190 = vmatmul.mubr.f32.gmra.mxu0 %v57
  %v191 = vpop.f32.mrf.mxu0
  %v192 = vadd.f32 0.0, %v191
  %v193 = vpop.f32.mrf.mxu0
  %194 = vmatprep.mubr.f32.mxu0 0.0
  %195 = vmatmul.mubr.f32.gmra.mxu0 %v58
  %v196 = vpop.f32.mrf.mxu0
  %v197 = vadd.f32 0.0, %v196
  %v198 = vpop.f32.mrf.mxu0
  %199 = vmatprep.mubr.f32.mxu0 0.0
  %200 = vmatmul.mubr.f32.gmra.mxu0 %v59
  %v201 = vpop.f32.mrf.mxu0
  %v202 = vadd.f32 0.0, %v201
  %v203 = vpop.f32.mrf.mxu0
  %204 = vmatprep.mubr.f32.mxu0 0.0
  %205 = vmatmul.mubr.f32.gmra.mxu0 %v60
  %v206 = vpop.f32.mrf.mxu0
  %v207 = vadd.f32 0.0, %v206
  %v208 = vpop.f32.mrf.mxu0
  %209 = vmatprep.mubr.f32.mxu0 0.0
  %210 = vmatmul.mubr.f32.gmra.mxu0 %v61
  %v211 = vpop.f32.mrf.mxu0
  %v212 = vadd.f32 0.0, %v211
  %v213 = vpop.f32.mrf.mxu0
  %214 = vmatprep.mubr.f32.mxu0 0.0
  %215 = vmatmul.mubr.f32.gmra.mxu0 %v62
  %v216 = vpop.f32.mrf.mxu0
  %v217 = vadd.f32 0.0, %v216
  %v218 = vpop.f32.mrf.mxu0
  %219 = vmatprep.mubr.f32.mxu0 0.0
  %220 = vmatmul.mubr.f32.gmra.mxu0 %v63
  %v221 = vpop.f32.mrf.mxu0
  %v222 = vadd.f32 0.0, %v221
  %v223 = vpop.f32.mrf.mxu0
  %224 = vmatprep.mubr.f32.mxu0 0.0
  %225 = vmatmul.mubr.f32.gmra.mxu0 %v64
  %v226 = vpop.f32.mrf.mxu0
  %v227 = vadd.f32 0.0, %v226
  %v228 = vpop.f32.mrf.mxu0
  %229 = vmatprep.mubr.f32.mxu0 0.0
  %230 = vmatmul.mubr.f32.gmra.mxu0 %v65
  %v231 = vpop.f32.mrf.mxu0
  %v232 = vadd.f32 0.0, %v231
  %v233 = vpop.f32.mrf.mxu0
  %234 = vmatprep.mubr.f32.mxu0 0.0
  %235 = vmatmul.mubr.f32.gmra.mxu0 %v66
  %v236 = vpop.f32.mrf.mxu0
  %v237 = vadd.f32 0.0, %v236
  %v238 = vpop.f32.mrf.mxu0
  %239 = vmatprep.mubr.f32.mxu0 0.0
  %240 = vmatmul.mubr.f32.gmra.mxu0 %v67
  %v241 = vpop.f32.mrf.mxu0
  %v242 = vadd.f32 0.0, %v241
  %v243 = vpop.f32.mrf.mxu0
  %244 = vmatprep.mubr.f32.mxu0 0.0
  %245 = vmatmul.mubr.f32.gmra.mxu0 %v68
  %v246 = vpop.f32.mrf.mxu0
  %v247 = vadd.f32 0.0, %v246
  %v248 = vpop.f32.mrf.mxu0
  %249 = vmatprep.mubr.f32.mxu0 0.0
  %250 = vmatmul.mubr.f32.gmra.mxu0 %v69
  %v251 = vpop.f32.mrf.mxu0
  %v252 = vadd.f32 0.0, %v251
  %v253 = vpop.f32.mrf.mxu0
  %254 = vmatprep.mubr.f32.mxu0 0.0
  %255 = vmatmul.mubr.f32.gmra.mxu0 %v70
  %v256 = vpop.f32.mrf.mxu0
  %v257 = vadd.f32 0.0, %v256
  %v258 = vpop.f32.mrf.mxu0
  %259 = vmatprep.mubr.f32.mxu0 0.0
  %260 = vmatmul.mubr.f32.gmra.mxu0 %v71
  %v261 = vpop.f32.mrf.mxu0
  %v262 = vadd.f32 0.0, %v261
  %v263 = vpop.f32.mrf.mxu0
  %264 = vmatprep.mubr.f32.mxu0 0.0
  %265 = vmatmul.mubr.f32.gmra.mxu0 %v72
  %v266 = vpop.f32.mrf.mxu0
  %v267 = vadd.f32 0.0, %v266
  %v268 = vpop.f32.mrf.mxu0
  %269 = vmatprep.mubr.f32.mxu0 0.0
  %270 = vmatmul.mubr.f32.gmra.mxu0 %v73
  %v271 = vpop.f32.mrf.mxu0
  %v272 = vadd.f32 0.0, %v271
  %v273 = vpop.f32.mrf.mxu0
  %274 = vmatprep.mubr.f32.mxu0 0.0
  %275 = vmatmul.mubr.f32.gmra.mxu0 %v74
  %v276 = vpop.f32.mrf.mxu0
  %v277 = vadd.f32 0.0, %v276
  %v278 = vpop.f32.mrf.mxu0
  %279 = vmatprep.mubr.f32.mxu0 0.0
  %280 = vmatmul.mubr.f32.gmra.mxu0 %v75
  %v281 = vpop.f32.mrf.mxu0
  %v282 = vadd.f32 0.0, %v281
  %v283 = vpop.f32.mrf.mxu0
  %284 = vmatprep.mubr.f32.mxu0 0.0
  %285 = vmatmul.mubr.f32.gmra.mxu0 %v76
  %v286 = vpop.f32.mrf.mxu0
  %v287 = vadd.f32 0.0, %v286
  %v288 = vpop.f32.mrf.mxu0
  %289 = vmatprep.mubr.f32.mxu0 0.0
  %290 = vmatmul.mubr.f32.gmra.mxu0 %v77
  %v291 = vpop.f32.mrf.mxu0
  %v292 = vadd.f32 0.0, %v291
  %v293 = vpop.f32.mrf.mxu0
  %294 = vmatprep.mubr.f32.mxu0 0.0
  %295 = vmatmul.mubr.f32.gmra.mxu0 %v78
  %v296 = vpop.f32.mrf.mxu0
  %v297 = vadd.f32 0.0, %v296
  %v298 = vpop.f32.mrf.mxu0
  %299 = vmatprep.mubr.f32.mxu0 0.0
  %300 = vmatmul.mubr.f32.gmra.mxu0 %v79
  %v301 = vpop.f32.mrf.mxu0
  %v302 = vadd.f32 0.0, %v301
  %v303 = vpop.f32.mrf.mxu0
  %304 = vmatprep.mubr.f32.mxu0 0.0
  %305 = vmatmul.mubr.f32.gmra.mxu0 %v80
  %v306 = vpop.f32.mrf.mxu0
  %v307 = vadd.f32 0.0, %v306
  %v308 = vpop.f32.mrf.mxu0
  %309 = vmatprep.mubr.f32.mxu0 0.0
  %310 = vmatmul.mubr.f32.gmra.mxu0 %v81
  %v311 = vpop.f32.mrf.mxu0
  %v312 = vadd.f32 0.0, %v311
  %v313 = vpop.f32.mrf.mxu0
  %314 = vmatprep.mubr.f32.mxu0 0.0
  %315 = vmatmul.mubr.f32.gmra.mxu0 %v82
  %v316 = vpop.f32.mrf.mxu0
  %v317 = vadd.f32 0.0, %v316
  %v318 = vpop.f32.mrf.mxu0
  %319 = vmatprep.mubr.f32.mxu0 0.0
  %320 = vmatmul.mubr.f32.gmra.mxu0 %v83
  %v321 = vpop.f32.mrf.mxu0
  %v322 = vadd.f32 0.0, %v321
  %v323 = vpop.f32.mrf.mxu0
  %324 = vmatprep.mubr.f32.mxu0 0.0
  %325 = vmatmul.mubr.f32.gmra.mxu0 %v84
  %v326 = vpop.f32.mrf.mxu0
  %v327 = vadd.f32 0.0, %v326
  %v328 = vpop.f32.mrf.mxu0
  %329 = vmatprep.mubr.f32.mxu0 0.0
  %330 = vmatmul.mubr.f32.gmra.mxu0 %v85
  %v331 = vpop.f32.mrf.mxu0
  %v332 = vadd.f32 0.0, %v331
  %v333 = vpop.f32.mrf.mxu0
  %334 = vmatprep.mubr.f32.mxu0 0.0
  %335 = vmatmul.mubr.f32.gmra.mxu0 %v86
  %v336 = vpop.f32.mrf.mxu0
  %v337 = vadd.f32 0.0, %v336
  %v338 = vpop.f32.mrf.mxu0
  %339 = vmatprep.mubr.f32.mxu0 0.0
  %340 = vmatmul.mubr.f32.gmra.mxu0 %v87
  %v341 = vpop.f32.mrf.mxu0
  %v342 = vadd.f32 0.0, %v341
  %v343 = vpop.f32.mrf.mxu0
  %344 = vmatprep.mubr.f32.mxu0 0.0
  %345 = vmatmul.mubr.f32.gmra.mxu0 %v88
  %v346 = vpop.f32.mrf.mxu0
  %v347 = vadd.f32 0.0, %v346
  %v348 = vpop.f32.mrf.mxu0
  %349 = vmatprep.mubr.f32.mxu0 0.0
  %350 = vmatmul.mubr.f32.gmra.mxu0 %v89
  %v351 = vpop.f32.mrf.mxu0
  %v352 = vadd.f32 0.0, %v351
  %v353 = vpop.f32.mrf.mxu0
  %354 = vmatprep.mubr.f32.mxu0 0.0
  %355 = vmatmul.mubr.f32.gmra.mxu0 %v90
  %v356 = vpop.f32.mrf.mxu0
  %v357 = vadd.f32 0.0, %v356
  %v358 = vpop.f32.mrf.mxu0
  %359 = vmatprep.mubr.f32.mxu0 0.0
  %360 = vmatmul.mubr.f32.gmra.mxu0 %v91
  %v361 = vpop.f32.mrf.mxu0
  %v362 = vadd.f32 0.0, %v361
  %v363 = vpop.f32.mrf.mxu0
  %364 = vmatprep.mubr.f32.mxu0 0.0
  %365 = vmatmul.mubr.f32.gmra.mxu0 %v92
  %v366 = vpop.f32.mrf.mxu0
  %v367 = vadd.f32 0.0, %v366
  %v368 = vpop.f32.mrf.mxu0
  %369 = vmatprep.mubr.f32.mxu0 0.0
  %370 = vmatmul.mubr.f32.gmra.mxu0 %v93
  %v371 = vpop.f32.mrf.mxu0
  %v372 = vadd.f32 0.0, %v371
  %v373 = vpop.f32.mrf.mxu0
  %374 = vmatprep.mubr.f32.mxu0 0.0
  %375 = vmatmul.mubr.f32.gmra.mxu0 %v94
  %v376 = vpop.f32.mrf.mxu0
  %v377 = vadd.f32 0.0, %v376
  %v378 = vpop.f32.mrf.mxu0
  %379 = vmatprep.mubr.f32.mxu0 0.0
  %380 = vmatmul.mubr.f32.gmra.mxu0 %v95
  %v381 = vpop.f32.mrf.mxu0
  %v382 = vadd.f32 0.0, %v381
  %v383 = vpop.f32.mrf.mxu0
  %384 = vmatprep.mubr.f32.mxu0 0.0
  %385 = vmatmul.mubr.f32.gmra.mxu0 %v96
  %v386 = vpop.f32.mrf.mxu0
  %v387 = vadd.f32 0.0, %v386
  %v388 = vpop.f32.mrf.mxu0
  %389 = vmatprep.mubr.f32.mxu0 0.0
  %390 = vmatmul.mubr.f32.gmra.mxu0 %v97
  %v391 = vpop.f32.mrf.mxu0
  %v392 = vadd.f32 0.0, %v391
  %v393 = vpop.f32.mrf.mxu0
  %394 = vmatprep.mubr.f32.mxu0 0.0
  %395 = vmatmul.mubr.f32.gmra.mxu0 %v98
  %v396 = vpop.f32.mrf.mxu0
  %v397 = vadd.f32 0.0, %v396
  %v398 = vpop.f32.mrf.mxu0
  %399 = vmatprep.mubr.f32.mxu0 0.0
  %400 = vmatmul.mubr.f32.gmra.mxu0 %v99
  %v401 = vpop.f32.mrf.mxu0
  %v402 = vadd.f32 0.0, %v401
  %v403 = vpop.f32.mrf.mxu0
  %404 = vdwg.mxu0
  %405 = vrot.lane.b32.xlu0 %v247, 32
  %v406 = vpop.permute.xlu0 %405
  %407 = vrot.lane.b32.xlu0 %v252, 32
  %v408 = vpop.permute.xlu0 %407
  %409 = vrot.lane.b32.xlu0 %v257, 32
  %v410 = vpop.permute.xlu0 %409
  %411 = vrot.lane.b32.xlu0 %v262, 32
  %v412 = vpop.permute.xlu0 %411
  %413 = vrot.lane.b32.xlu0 %v267, 32
  %v414 = vpop.permute.xlu0 %413
  %415 = vrot.lane.b32.xlu0 %v272, 32
  %v416 = vpop.permute.xlu0 %415
  %417 = vrot.lane.b32.xlu0 %v277, 32
  %v418 = vpop.permute.xlu0 %417
  %419 = vrot.lane.b32.xlu0 %v282, 32
  %v420 = vpop.permute.xlu0 %419
  %421 = vrot.lane.b32.xlu0 %v287, 32
  %v422 = vpop.permute.xlu0 %421
  %423 = vrot.lane.b32.xlu0 %v292, 32
  %v424 = vpop.permute.xlu0 %423
  %425 = vrot.lane.b32.xlu0 %v297, 32
  %v426 = vpop.permute.xlu0 %425
  %427 = vrot.lane.b32.xlu0 %v302, 32
  %v428 = vpop.permute.xlu0 %427
  %429 = vrot.lane.b32.xlu0 %v307, 32
  %v430 = vpop.permute.xlu0 %429
  %431 = vrot.lane.b32.xlu0 %v312, 32
  %v432 = vpop.permute.xlu0 %431
  %433 = vrot.lane.b32.xlu0 %v317, 32
  %v434 = vpop.permute.xlu0 %433
  %435 = vrot.lane.b32.xlu0 %v322, 32
  %v436 = vpop.permute.xlu0 %435
  %v437 = vadd.f32 %v167, %v406
  %v438 = vadd.f32 %v172, %v408
  %v439 = vadd.f32 %v177, %v410
  %v440 = vadd.f32 %v182, %v412
  %v441 = vadd.f32 %v187, %v414
  %v442 = vadd.f32 %v192, %v416
  %v443 = vadd.f32 %v197, %v418
  %v444 = vadd.f32 %v202, %v420
  %v445 = vadd.f32 %v207, %v422
  %v446 = vadd.f32 %v212, %v424
  %v447 = vadd.f32 %v217, %v426
  %v448 = vadd.f32 %v222, %v428
  %v449 = vadd.f32 %v227, %v430
  %v450 = vadd.f32 %v232, %v432
  %v451 = vadd.f32 %v237, %v434
  %v452 = vadd.f32 %v242, %v436
  %453 = vrot.lane.b32.xlu0 %v327, 64
  %v454 = vpop.permute.xlu0 %453
  %455 = vrot.lane.b32.xlu0 %v332, 64
  %v456 = vpop.permute.xlu0 %455
  %457 = vrot.lane.b32.xlu0 %v337, 64
  %v458 = vpop.permute.xlu0 %457
  %459 = vrot.lane.b32.xlu0 %v342, 64
  %v460 = vpop.permute.xlu0 %459
  %461 = vrot.lane.b32.xlu0 %v347, 64
  %v462 = vpop.permute.xlu0 %461
  %463 = vrot.lane.b32.xlu0 %v352, 64
  %v464 = vpop.permute.xlu0 %463
  %465 = vrot.lane.b32.xlu0 %v357, 64
  %v466 = vpop.permute.xlu0 %465
  %467 = vrot.lane.b32.xlu0 %v362, 64
  %v468 = vpop.permute.xlu0 %467
  %469 = vrot.lane.b32.xlu0 %v367, 64
  %v470 = vpop.permute.xlu0 %469
  %471 = vrot.lane.b32.xlu0 %v372, 64
  %v472 = vpop.permute.xlu0 %471
  %473 = vrot.lane.b32.xlu0 %v377, 64
  %v474 = vpop.permute.xlu0 %473
  %475 = vrot.lane.b32.xlu0 %v382, 64
  %v476 = vpop.permute.xlu0 %475
  %477 = vrot.lane.b32.xlu0 %v387, 64
  %v478 = vpop.permute.xlu0 %477
  %479 = vrot.lane.b32.xlu0 %v392, 64
  %v480 = vpop.permute.xlu0 %479
  %481 = vrot.lane.b32.xlu0 %v397, 64
  %v482 = vpop.permute.xlu0 %481
  %483 = vrot.lane.b32.xlu0 %v402, 64
  %v484 = vpop.permute.xlu0 %483
  %v485 = vadd.f32 %v437, %v454
  %v486 = vadd.f32 %v438, %v456
  %v487 = vadd.f32 %v439, %v458
  %v488 = vadd.f32 %v440, %v460
  %v489 = vadd.f32 %v441, %v462
  %v490 = vadd.f32 %v442, %v464
  %v491 = vadd.f32 %v443, %v466
  %v492 = vadd.f32 %v444, %v468
  %v493 = vadd.f32 %v445, %v470
  %v494 = vadd.f32 %v446, %v472
  %v495 = vadd.f32 %v447, %v474
  %v496 = vadd.f32 %v448, %v476
  %v497 = vadd.f32 %v449, %v478
  %v498 = vadd.f32 %v450, %v480
  %v499 = vadd.f32 %v451, %v482
  %v500 = vadd.f32 %v452, %v484
  %v501 = vld [vmem:[%s3] sm:$0xff]
  %v502 = vld [vmem:[%s3 + $0x8] sm:$0xff]
  %v503 = vld [vmem:[%s3 + $0x10] sm:$0xff]
  %v504 = vld [vmem:[%s3 + $0x18] sm:$0xff]
  %v505 = vld [vmem:[%s3 + $0x20] sm:$0xff]
  %v506 = vld [vmem:[%s3 + $0x28] sm:$0xff]
  %v507 = vld [vmem:[%s3 + $0x30] sm:$0xff]
  %v508 = vld [vmem:[%s3 + $0x38] sm:$0xff]
  %v509 = vld [vmem:[%s3 + $0x40] sm:$0xff]
  %v510 = vld [vmem:[%s3 + $0x48] sm:$0xff]
  %v511 = vld [vmem:[%s3 + $0x50] sm:$0xff]
  %v512 = vld [vmem:[%s3 + $0x58] sm:$0xff]
  %v513 = vld [vmem:[%s3 + $0x60] sm:$0xff]
  %v514 = vld [vmem:[%s3 + $0x68] sm:$0xff]
  %v515 = vld [vmem:[%s3 + $0x70] sm:$0xff]
  %v516 = vld [vmem:[%s3 + $0x78] sm:$0xff]
  %v517 = vld [vmem:[%s4] sm:$0x1]
  %v519 = vlaneseq
  %v520 = vshrl.u32 %v519, 7
  %v521 = vsub.s32 0, %v520
  %v522 = vrot.slane %v517, %v521
  %524 = vmatprep.subr.mxu0 0.0
  %525 = vmatpush1.msra.mxu0 %v516
  %526 = vmatprep.subr.mxu0 0.0
  %527 = vmatpush1.msra.mxu0 %v515
  %528 = vmatprep.subr.mxu0 0.0
  %529 = vmatpush1.msra.mxu0 %v514
  %530 = vmatprep.subr.mxu0 0.0
  %531 = vmatpush1.msra.mxu0 %v513
  %532 = vmatprep.subr.mxu0 0.0
  %533 = vmatpush1.msra.mxu0 %v512
  %534 = vmatprep.subr.mxu0 0.0
  %535 = vmatpush1.msra.mxu0 %v511
  %536 = vmatprep.subr.mxu0 0.0
  %537 = vmatpush1.msra.mxu0 %v510
  %538 = vmatprep.subr.mxu0 0.0
  %539 = vmatpush1.msra.mxu0 %v509
  %540 = vmatprep.subr.mxu0 0.0
  %541 = vmatpush1.msra.mxu0 %v508
  %542 = vmatprep.subr.mxu0 0.0
  %543 = vmatpush1.msra.mxu0 %v507
  %544 = vmatprep.subr.mxu0 0.0
  %545 = vmatpush1.msra.mxu0 %v506
  %546 = vmatprep.subr.mxu0 0.0
  %547 = vmatpush1.msra.mxu0 %v505
  %548 = vmatprep.subr.mxu0 0.0
  %549 = vmatpush1.msra.mxu0 %v504
  %550 = vmatprep.subr.mxu0 0.0
  %551 = vmatpush1.msra.mxu0 %v503
  %552 = vmatprep.subr.mxu0 0.0
  %553 = vmatpush1.msra.mxu0 %v502
  %554 = vmatprep.subr.mxu0 0.0
  %555 = vmatpush1.msra.mxu0 %v501
  %556 = vmatprep.subr.mxu0 0.0
  %557 = vmatpush2.msra.mxu0 0.0
  %558 = vmatprep.subr.mxu0 0.0
  %559 = vmatpush2.msra.mxu0 0.0
  %560 = vmatprep.subr.mxu0 0.0
  %561 = vmatpush2.msra.mxu0 0.0
  %562 = vmatprep.subr.mxu0 0.0
  %563 = vmatpush2.msra.mxu0 0.0
  %564 = vmatprep.subr.mxu0 0.0
  %565 = vmatpush2.msra.mxu0 0.0
  %566 = vmatprep.subr.mxu0 0.0
  %567 = vmatpush2.msra.mxu0 0.0
  %568 = vmatprep.subr.mxu0 0.0
  %569 = vmatpush2.msra.mxu0 0.0
  %570 = vmatprep.subr.mxu0 0.0
  %571 = vmatpush2.msra.mxu0 0.0
  %572 = vmatprep.subr.mxu0 0.0
  %573 = vmatpush2.msra.mxu0 0.0
  %574 = vmatprep.subr.mxu0 0.0
  %575 = vmatpush2.msra.mxu0 0.0
  %576 = vmatprep.subr.mxu0 0.0
  %577 = vmatpush2.msra.mxu0 0.0
  %578 = vmatprep.subr.mxu0 0.0
  %579 = vmatpush2.msra.mxu0 0.0
  %580 = vmatprep.subr.mxu0 0.0
  %581 = vmatpush2.msra.mxu0 0.0
  %582 = vmatprep.subr.mxu0 0.0
  %583 = vmatpush2.msra.mxu0 0.0
  %584 = vmatprep.subr.mxu0 0.0
  %585 = vmatpush2.msra.mxu0 0.0
  %586 = vmatprep.subr.mxu0 0.0
  %587 = vmatpush2.msra.mxu0 0.0
  %588 = vmatprep.mubr.f32.mxu0 0.0
  %589 = vmatmul.mubr.f32.gmra.mxu0 %v485
  %v590 = vpop.f32.mrf.mxu0
  %v591 = vadd.f32 %v522, %v590
  %v592 = vpop.f32.mrf.mxu0
  %593 = vmatprep.mubr.f32.mxu0 0.0
  %594 = vmatmul.mubr.f32.gmra.mxu0 %v486
  %v595 = vpop.f32.mrf.mxu0
  %v596 = vadd.f32 %v522, %v595
  %v597 = vpop.f32.mrf.mxu0
  %598 = vmatprep.mubr.f32.mxu0 0.0
  %599 = vmatmul.mubr.f32.gmra.mxu0 %v487
  %v600 = vpop.f32.mrf.mxu0
  %v601 = vadd.f32 %v522, %v600
  %v602 = vpop.f32.mrf.mxu0
  %603 = vmatprep.mubr.f32.mxu0 0.0
  %604 = vmatmul.mubr.f32.gmra.mxu0 %v488
  %v605 = vpop.f32.mrf.mxu0
  %v606 = vadd.f32 %v522, %v605
  %v607 = vpop.f32.mrf.mxu0
  %608 = vmatprep.mubr.f32.mxu0 0.0
  %609 = vmatmul.mubr.f32.gmra.mxu0 %v489
  %v610 = vpop.f32.mrf.mxu0
  %v611 = vadd.f32 %v522, %v610
  %v612 = vpop.f32.mrf.mxu0
  %613 = vmatprep.mubr.f32.mxu0 0.0
  %614 = vmatmul.mubr.f32.gmra.mxu0 %v490
  %v615 = vpop.f32.mrf.mxu0
  %v616 = vadd.f32 %v522, %v615
  %v617 = vpop.f32.mrf.mxu0
  %618 = vmatprep.mubr.f32.mxu0 0.0
  %619 = vmatmul.mubr.f32.gmra.mxu0 %v491
  %v620 = vpop.f32.mrf.mxu0
  %v621 = vadd.f32 %v522, %v620
  %v622 = vpop.f32.mrf.mxu0
  %623 = vmatprep.mubr.f32.mxu0 0.0
  %624 = vmatmul.mubr.f32.gmra.mxu0 %v492
  %v625 = vpop.f32.mrf.mxu0
  %v626 = vadd.f32 %v522, %v625
  %v627 = vpop.f32.mrf.mxu0
  %628 = vmatprep.mubr.f32.mxu0 0.0
  %629 = vmatmul.mubr.f32.gmra.mxu0 %v493
  %v630 = vpop.f32.mrf.mxu0
  %v631 = vadd.f32 %v522, %v630
  %v632 = vpop.f32.mrf.mxu0
  %633 = vmatprep.mubr.f32.mxu0 0.0
  %634 = vmatmul.mubr.f32.gmra.mxu0 %v494
  %v635 = vpop.f32.mrf.mxu0
  %v636 = vadd.f32 %v522, %v635
  %v637 = vpop.f32.mrf.mxu0
  %638 = vmatprep.mubr.f32.mxu0 0.0
  %639 = vmatmul.mubr.f32.gmra.mxu0 %v495
  %v640 = vpop.f32.mrf.mxu0
  %v641 = vadd.f32 %v522, %v640
  %v642 = vpop.f32.mrf.mxu0
  %643 = vmatprep.mubr.f32.mxu0 0.0
  %644 = vmatmul.mubr.f32.gmra.mxu0 %v496
  %v645 = vpop.f32.mrf.mxu0
  %v646 = vadd.f32 %v522, %v645
  %v647 = vpop.f32.mrf.mxu0
  %648 = vmatprep.mubr.f32.mxu0 0.0
  %649 = vmatmul.mubr.f32.gmra.mxu0 %v497
  %v650 = vpop.f32.mrf.mxu0
  %v651 = vadd.f32 %v522, %v650
  %v652 = vpop.f32.mrf.mxu0
  %653 = vmatprep.mubr.f32.mxu0 0.0
  %654 = vmatmul.mubr.f32.gmra.mxu0 %v498
  %v655 = vpop.f32.mrf.mxu0
  %v656 = vadd.f32 %v522, %v655
  %v657 = vpop.f32.mrf.mxu0
  %658 = vmatprep.mubr.f32.mxu0 0.0
  %659 = vmatmul.mubr.f32.gmra.mxu0 %v499
  %v660 = vpop.f32.mrf.mxu0
  %v661 = vadd.f32 %v522, %v660
  %v662 = vpop.f32.mrf.mxu0
  %663 = vmatprep.mubr.f32.mxu0 0.0
  %664 = vmatmul.mubr.f32.gmra.mxu0 %v500
  %v665 = vpop.f32.mrf.mxu0
  %v666 = vadd.f32 %v522, %v665
  %v667 = vpop.f32.mrf.mxu0
  %668 = vdwg.mxu0
  %v670 = vlaneseq
  %v671 = vshrl.u32 %v670, 7
  %v672 = vsub.s32 0, %v671
  %v673 = vrot.slane %v34, %v672
  %v675 = vmul.f32 %v591, %v673
  %v676 = vmul.f32 %v596, %v673
  %v677 = vmul.f32 %v601, %v673
  %v678 = vmul.f32 %v606, %v673
  %v679 = vmul.f32 %v611, %v673
  %v680 = vmul.f32 %v616, %v673
  %v681 = vmul.f32 %v621, %v673
  %v682 = vmul.f32 %v626, %v673
  %v683 = vmul.f32 %v631, %v673
  %v684 = vmul.f32 %v636, %v673
  %v685 = vmul.f32 %v641, %v673
  %v686 = vmul.f32 %v646, %v673
  %v687 = vmul.f32 %v651, %v673
  %v688 = vmul.f32 %v656, %v673
  %v689 = vmul.f32 %v661, %v673
  %v690 = vmul.f32 %v666, %v673
  %691 = vadd.xlane.f32.xlu0 %v675
  %v692 = vpop.xlane.xlu0 %691
  %693 = vadd.xlane.f32.xlu0 %v676
  %v694 = vpop.xlane.xlu0 %693
  %695 = vadd.xlane.f32.xlu0 %v677
  %v696 = vpop.xlane.xlu0 %695
  %697 = vadd.xlane.f32.xlu0 %v678
  %v698 = vpop.xlane.xlu0 %697
  %699 = vadd.xlane.f32.xlu0 %v679
  %v700 = vpop.xlane.xlu0 %699
  %701 = vadd.xlane.f32.xlu0 %v680
  %v702 = vpop.xlane.xlu0 %701
  %703 = vadd.xlane.f32.xlu0 %v681
  %v704 = vpop.xlane.xlu0 %703
  %705 = vadd.xlane.f32.xlu0 %v682
  %v706 = vpop.xlane.xlu0 %705
  %707 = vadd.xlane.f32.xlu0 %v683
  %v708 = vpop.xlane.xlu0 %707
  %709 = vadd.xlane.f32.xlu0 %v684
  %v710 = vpop.xlane.xlu0 %709
  %711 = vadd.xlane.f32.xlu0 %v685
  %v712 = vpop.xlane.xlu0 %711
  %713 = vadd.xlane.f32.xlu0 %v686
  %v714 = vpop.xlane.xlu0 %713
  %715 = vadd.xlane.f32.xlu0 %v687
  %v716 = vpop.xlane.xlu0 %715
  %717 = vadd.xlane.f32.xlu0 %v688
  %v718 = vpop.xlane.xlu0 %717
  %719 = vadd.xlane.f32.xlu0 %v689
  %v720 = vpop.xlane.xlu0 %719
  %721 = vadd.xlane.f32.xlu0 %v690
  %v722 = vpop.xlane.xlu0 %721
  %v723 = vstv %s33
  %v724 = vadd.f32 %v692, %v723
  %v725 = vadd.f32 %v694, %v723
  %v726 = vadd.f32 %v696, %v723
  %v727 = vadd.f32 %v698, %v723
  %v728 = vadd.f32 %v700, %v723
  %v729 = vadd.f32 %v702, %v723
  %v730 = vadd.f32 %v704, %v723
  %v731 = vadd.f32 %v706, %v723
  %v732 = vadd.f32 %v708, %v723
  %v733 = vadd.f32 %v710, %v723
  %v734 = vadd.f32 %v712, %v723
  %v735 = vadd.f32 %v714, %v723
  %v736 = vadd.f32 %v716, %v723
  %v737 = vadd.f32 %v718, %v723
  %v738 = vadd.f32 %v720, %v723
  %v739 = vadd.f32 %v722, %v723
  %v740 = vxor.u32 %v724, 2147483648
  %v741 = vxor.u32 %v725, 2147483648
  %v742 = vxor.u32 %v726, 2147483648
  %v743 = vxor.u32 %v727, 2147483648
  %v744 = vxor.u32 %v728, 2147483648
  %v745 = vxor.u32 %v729, 2147483648
  %v746 = vxor.u32 %v730, 2147483648
  %v747 = vxor.u32 %v731, 2147483648
  %v748 = vxor.u32 %v732, 2147483648
  %v749 = vxor.u32 %v733, 2147483648
  %v750 = vxor.u32 %v734, 2147483648
  %v751 = vxor.u32 %v735, 2147483648
  %v752 = vxor.u32 %v736, 2147483648
  %v753 = vxor.u32 %v737, 2147483648
  %v754 = vxor.u32 %v738, 2147483648
  %v755 = vxor.u32 %v739, 2147483648
  %v756 = vmul.f32 %v740, 1.442695
  %v757 = vpow.pop %v756
  %v758 = vmul.f32 %v741, 1.442695
  %v759 = vpow.pop %v758
  %v760 = vmul.f32 %v742, 1.442695
  %v761 = vpow.pop %v760
  %v762 = vmul.f32 %v743, 1.442695
  %v763 = vpow.pop %v762
  %v764 = vmul.f32 %v744, 1.442695
  %v765 = vpow.pop %v764
  %v766 = vmul.f32 %v745, 1.442695
  %v767 = vpow.pop %v766
  %v768 = vmul.f32 %v746, 1.442695
  %v769 = vpow.pop %v768
  %v770 = vmul.f32 %v747, 1.442695
  %v771 = vpow.pop %v770
  %v772 = vmul.f32 %v748, 1.442695
  %v773 = vpow.pop %v772
  %v774 = vmul.f32 %v749, 1.442695
  %v775 = vpow.pop %v774
  %v776 = vmul.f32 %v750, 1.442695
  %v777 = vpow.pop %v776
  %v778 = vmul.f32 %v751, 1.442695
  %v779 = vpow.pop %v778
  %v780 = vmul.f32 %v752, 1.442695
  %v781 = vpow.pop %v780
  %v782 = vmul.f32 %v753, 1.442695
  %v783 = vpow.pop %v782
  %v784 = vmul.f32 %v754, 1.442695
  %v785 = vpow.pop %v784
  %v786 = vmul.f32 %v755, 1.442695
  %v787 = vpow.pop %v786
  %v788 = vadd.f32 %v757, 1.0
  %v789 = vadd.f32 %v759, 1.0
  %v790 = vadd.f32 %v761, 1.0
  %v791 = vadd.f32 %v763, 1.0
  %v792 = vadd.f32 %v765, 1.0
  %v793 = vadd.f32 %v767, 1.0
  %v794 = vadd.f32 %v769, 1.0
  %v795 = vadd.f32 %v771, 1.0
  %v796 = vadd.f32 %v773, 1.0
  %v797 = vadd.f32 %v775, 1.0
  %v798 = vadd.f32 %v777, 1.0
  %v799 = vadd.f32 %v779, 1.0
  %v800 = vadd.f32 %v781, 1.0
  %v801 = vadd.f32 %v783, 1.0
  %v802 = vadd.f32 %v785, 1.0
  %v803 = vadd.f32 %v787, 1.0
  %v804 = vrcp.pop %v788
  %v805 = vmul.f32 1.0, %v804
  %v806 = vrcp.pop %v789
  %v807 = vmul.f32 1.0, %v806
  %v808 = vrcp.pop %v790
  %v809 = vmul.f32 1.0, %v808
  %v810 = vrcp.pop %v791
  %v811 = vmul.f32 1.0, %v810
  %v812 = vrcp.pop %v792
  %v813 = vmul.f32 1.0, %v812
  %v814 = vrcp.pop %v793
  %v815 = vmul.f32 1.0, %v814
  %v816 = vrcp.pop %v794
  %v817 = vmul.f32 1.0, %v816
  %v818 = vrcp.pop %v795
  %v819 = vmul.f32 1.0, %v818
  %v820 = vrcp.pop %v796
  %v821 = vmul.f32 1.0, %v820
  %v822 = vrcp.pop %v797
  %v823 = vmul.f32 1.0, %v822
  %v824 = vrcp.pop %v798
  %v825 = vmul.f32 1.0, %v824
  %v826 = vrcp.pop %v799
  %v827 = vmul.f32 1.0, %v826
  %v828 = vrcp.pop %v800
  %v829 = vmul.f32 1.0, %v828
  %v830 = vrcp.pop %v801
  %v831 = vmul.f32 1.0, %v830
  %v832 = vrcp.pop %v802
  %v833 = vmul.f32 1.0, %v832
  %v834 = vrcp.pop %v803
  %v835 = vmul.f32 1.0, %v834
  %v836 = vmul.f32 %v805, %v591
  %v837 = vmul.f32 %v807, %v596
  %v838 = vmul.f32 %v809, %v601
  %v839 = vmul.f32 %v811, %v606
  %v840 = vmul.f32 %v813, %v611
  %v841 = vmul.f32 %v815, %v616
  %v842 = vmul.f32 %v817, %v621
  %v843 = vmul.f32 %v819, %v626
  %v844 = vmul.f32 %v821, %v631
  %v845 = vmul.f32 %v823, %v636
  %v846 = vmul.f32 %v825, %v641
  %v847 = vmul.f32 %v827, %v646
  %v848 = vmul.f32 %v829, %v651
  %v849 = vmul.f32 %v831, %v656
  %v850 = vmul.f32 %v833, %v661
  %v851 = vmul.f32 %v835, %v666
  %v852 = vadd.f32 %v36, %v836
  %v853 = vadd.f32 %v37, %v837
  %v854 = vadd.f32 %v38, %v838
  %v855 = vadd.f32 %v39, %v839
  %v856 = vadd.f32 %v40, %v840
  %v857 = vadd.f32 %v41, %v841
  %v858 = vadd.f32 %v42, %v842
  %v859 = vadd.f32 %v43, %v843
  %v860 = vadd.f32 %v44, %v844
  %v861 = vadd.f32 %v45, %v845
  %v862 = vadd.f32 %v46, %v846
  %v863 = vadd.f32 %v47, %v847
  %v864 = vadd.f32 %v48, %v848
  %v865 = vadd.f32 %v49, %v849
  %v866 = vadd.f32 %v50, %v850
  %v867 = vadd.f32 %v51, %v851
  %868 = vadd.xlane.f32.xlu0 %v852
  %v869 = vpop.xlane.xlu0 %868
  %870 = vadd.xlane.f32.xlu0 %v853
  %v871 = vpop.xlane.xlu0 %870
  %872 = vadd.xlane.f32.xlu0 %v854
  %v873 = vpop.xlane.xlu0 %872
  %874 = vadd.xlane.f32.xlu0 %v855
  %v875 = vpop.xlane.xlu0 %874
  %876 = vadd.xlane.f32.xlu0 %v856
  %v877 = vpop.xlane.xlu0 %876
  %878 = vadd.xlane.f32.xlu0 %v857
  %v879 = vpop.xlane.xlu0 %878
  %880 = vadd.xlane.f32.xlu0 %v858
  %v881 = vpop.xlane.xlu0 %880
  %882 = vadd.xlane.f32.xlu0 %v859
  %v883 = vpop.xlane.xlu0 %882
  %884 = vadd.xlane.f32.xlu0 %v860
  %v885 = vpop.xlane.xlu0 %884
  %886 = vadd.xlane.f32.xlu0 %v861
  %v887 = vpop.xlane.xlu0 %886
  %888 = vadd.xlane.f32.xlu0 %v862
  %v889 = vpop.xlane.xlu0 %888
  %890 = vadd.xlane.f32.xlu0 %v863
  %v891 = vpop.xlane.xlu0 %890
  %892 = vadd.xlane.f32.xlu0 %v864
  %v893 = vpop.xlane.xlu0 %892
  %894 = vadd.xlane.f32.xlu0 %v865
  %v895 = vpop.xlane.xlu0 %894
  %896 = vadd.xlane.f32.xlu0 %v866
  %v897 = vpop.xlane.xlu0 %896
  %898 = vadd.xlane.f32.xlu0 %v867
  %v899 = vpop.xlane.xlu0 %898
  %v900 = vmul.f32 %v869, 0.03125
  %v901 = vmul.f32 %v871, 0.03125
  %v902 = vmul.f32 %v873, 0.03125
  %v903 = vmul.f32 %v875, 0.03125
  %v904 = vmul.f32 %v877, 0.03125
  %v905 = vmul.f32 %v879, 0.03125
  %v906 = vmul.f32 %v881, 0.03125
  %v907 = vmul.f32 %v883, 0.03125
  %v908 = vmul.f32 %v885, 0.03125
  %v909 = vmul.f32 %v887, 0.03125
  %v910 = vmul.f32 %v889, 0.03125
  %v911 = vmul.f32 %v891, 0.03125
  %v912 = vmul.f32 %v893, 0.03125
  %v913 = vmul.f32 %v895, 0.03125
  %v914 = vmul.f32 %v897, 0.03125
  %v915 = vmul.f32 %v899, 0.03125
  %v916 = vsub.f32 %v852, %v900
  %v917 = vsub.f32 %v853, %v901
  %v918 = vsub.f32 %v854, %v902
  %v919 = vsub.f32 %v855, %v903
  %v920 = vsub.f32 %v856, %v904
  %v921 = vsub.f32 %v857, %v905
  %v922 = vsub.f32 %v858, %v906
  %v923 = vsub.f32 %v859, %v907
  %v924 = vsub.f32 %v860, %v908
  %v925 = vsub.f32 %v861, %v909
  %v926 = vsub.f32 %v862, %v910
  %v927 = vsub.f32 %v863, %v911
  %v928 = vsub.f32 %v864, %v912
  %v929 = vsub.f32 %v865, %v913
  %v930 = vsub.f32 %v866, %v914
  %v931 = vsub.f32 %v867, %v915
  %v933 = vlaneseq
  %v934 = vshrl.u32 %v933, 7
  %v935 = vsub.s32 0, %v934
  %v936 = vrot.slane %v35, %v935
  %v938 = vmul.f32 %v916, %v936
  %v939 = vmul.f32 %v917, %v936
  %v940 = vmul.f32 %v918, %v936
  %v941 = vmul.f32 %v919, %v936
  %v942 = vmul.f32 %v920, %v936
  %v943 = vmul.f32 %v921, %v936
  %v944 = vmul.f32 %v922, %v936
  %v945 = vmul.f32 %v923, %v936
  %v946 = vmul.f32 %v924, %v936
  %v947 = vmul.f32 %v925, %v936
  %v948 = vmul.f32 %v926, %v936
  %v949 = vmul.f32 %v927, %v936
  %v950 = vmul.f32 %v928, %v936
  %v951 = vmul.f32 %v929, %v936
  %v952 = vmul.f32 %v930, %v936
  %v953 = vmul.f32 %v931, %v936
  %v954 = vmul.f32 %v938, %v938
  %v955 = vmul.f32 %v939, %v939
  %v956 = vmul.f32 %v940, %v940
  %v957 = vmul.f32 %v941, %v941
  %v958 = vmul.f32 %v942, %v942
  %v959 = vmul.f32 %v943, %v943
  %v960 = vmul.f32 %v944, %v944
  %v961 = vmul.f32 %v945, %v945
  %v962 = vmul.f32 %v946, %v946
  %v963 = vmul.f32 %v947, %v947
  %v964 = vmul.f32 %v948, %v948
  %v965 = vmul.f32 %v949, %v949
  %v966 = vmul.f32 %v950, %v950
  %v967 = vmul.f32 %v951, %v951
  %v968 = vmul.f32 %v952, %v952
  %v969 = vmul.f32 %v953, %v953
  %970 = vadd.xlane.f32.xlu0 %v954
  %v971 = vpop.xlane.xlu0 %970
  %972 = vadd.xlane.f32.xlu0 %v955
  %v973 = vpop.xlane.xlu0 %972
  %974 = vadd.xlane.f32.xlu0 %v956
  %v975 = vpop.xlane.xlu0 %974
  %976 = vadd.xlane.f32.xlu0 %v957
  %v977 = vpop.xlane.xlu0 %976
  %978 = vadd.xlane.f32.xlu0 %v958
  %v979 = vpop.xlane.xlu0 %978
  %980 = vadd.xlane.f32.xlu0 %v959
  %v981 = vpop.xlane.xlu0 %980
  %982 = vadd.xlane.f32.xlu0 %v960
  %v983 = vpop.xlane.xlu0 %982
  %984 = vadd.xlane.f32.xlu0 %v961
  %v985 = vpop.xlane.xlu0 %984
  %986 = vadd.xlane.f32.xlu0 %v962
  %v987 = vpop.xlane.xlu0 %986
  %988 = vadd.xlane.f32.xlu0 %v963
  %v989 = vpop.xlane.xlu0 %988
  %990 = vadd.xlane.f32.xlu0 %v964
  %v991 = vpop.xlane.xlu0 %990
  %992 = vadd.xlane.f32.xlu0 %v965
  %v993 = vpop.xlane.xlu0 %992
  %994 = vadd.xlane.f32.xlu0 %v966
  %v995 = vpop.xlane.xlu0 %994
  %996 = vadd.xlane.f32.xlu0 %v967
  %v997 = vpop.xlane.xlu0 %996
  %998 = vadd.xlane.f32.xlu0 %v968
  %v999 = vpop.xlane.xlu0 %998
  %1000 = vadd.xlane.f32.xlu0 %v969
  %v1001 = vpop.xlane.xlu0 %1000
  %v1002 = vmul.f32 %v971, 0.03125
  %v1003 = vmul.f32 %v973, 0.03125
  %v1004 = vmul.f32 %v975, 0.03125
  %v1005 = vmul.f32 %v977, 0.03125
  %v1006 = vmul.f32 %v979, 0.03125
  %v1007 = vmul.f32 %v981, 0.03125
  %v1008 = vmul.f32 %v983, 0.03125
  %v1009 = vmul.f32 %v985, 0.03125
  %v1010 = vmul.f32 %v987, 0.03125
  %v1011 = vmul.f32 %v989, 0.03125
  %v1012 = vmul.f32 %v991, 0.03125
  %v1013 = vmul.f32 %v993, 0.03125
  %v1014 = vmul.f32 %v995, 0.03125
  %v1015 = vmul.f32 %v997, 0.03125
  %v1016 = vmul.f32 %v999, 0.03125
  %v1017 = vmul.f32 %v1001, 0.03125
  %v1018 = vadd.f32 %v1002, 1e-05
  %v1019 = vadd.f32 %v1003, 1e-05
  %v1020 = vadd.f32 %v1004, 1e-05
  %v1021 = vadd.f32 %v1005, 1e-05
  %v1022 = vadd.f32 %v1006, 1e-05
  %v1023 = vadd.f32 %v1007, 1e-05
  %v1024 = vadd.f32 %v1008, 1e-05
  %v1025 = vadd.f32 %v1009, 1e-05
  %v1026 = vadd.f32 %v1010, 1e-05
  %v1027 = vadd.f32 %v1011, 1e-05
  %v1028 = vadd.f32 %v1012, 1e-05
  %v1029 = vadd.f32 %v1013, 1e-05
  %v1030 = vadd.f32 %v1014, 1e-05
  %v1031 = vadd.f32 %v1015, 1e-05
  %v1032 = vadd.f32 %v1016, 1e-05
  %v1033 = vadd.f32 %v1017, 1e-05
  %v1034 = vrsqrt.pop %v1018
  %v1035 = vrsqrt.pop %v1019
  %v1036 = vrsqrt.pop %v1020
  %v1037 = vrsqrt.pop %v1021
  %v1038 = vrsqrt.pop %v1022
  %v1039 = vrsqrt.pop %v1023
  %v1040 = vrsqrt.pop %v1024
  %v1041 = vrsqrt.pop %v1025
  %v1042 = vrsqrt.pop %v1026
  %v1043 = vrsqrt.pop %v1027
  %v1044 = vrsqrt.pop %v1028
  %v1045 = vrsqrt.pop %v1029
  %v1046 = vrsqrt.pop %v1030
  %v1047 = vrsqrt.pop %v1031
  %v1048 = vrsqrt.pop %v1032
  %v1049 = vrsqrt.pop %v1033
  %v1050 = vmul.f32 %v938, %v1034
  %v1051 = vmul.f32 %v939, %v1035
  %v1052 = vmul.f32 %v940, %v1036
  %v1053 = vmul.f32 %v941, %v1037
  %v1054 = vmul.f32 %v942, %v1038
  %v1055 = vmul.f32 %v943, %v1039
  %v1056 = vmul.f32 %v944, %v1040
  %v1057 = vmul.f32 %v945, %v1041
  %v1058 = vmul.f32 %v946, %v1042
  %v1059 = vmul.f32 %v947, %v1043
  %v1060 = vmul.f32 %v948, %v1044
  %v1061 = vmul.f32 %v949, %v1045
  %v1062 = vmul.f32 %v950, %v1046
  %v1063 = vmul.f32 %v951, %v1047
  %v1064 = vmul.f32 %v952, %v1048
  %v1065 = vmul.f32 %v953, %v1049
  %v1066 = vld [vmem:[%s6] sm:$0x1]
  %v1068 = vlaneseq
  %v1069 = vshrl.u32 %v1068, 7
  %v1070 = vsub.s32 0, %v1069
  %v1071 = vrot.slane %v1066, %v1070
  %v1073 = vmul.f32 %v1050, %v1071
  %v1074 = vmul.f32 %v1051, %v1071
  %v1075 = vmul.f32 %v1052, %v1071
  %v1076 = vmul.f32 %v1053, %v1071
  %v1077 = vmul.f32 %v1054, %v1071
  %v1078 = vmul.f32 %v1055, %v1071
  %v1079 = vmul.f32 %v1056, %v1071
  %v1080 = vmul.f32 %v1057, %v1071
  %v1081 = vmul.f32 %v1058, %v1071
  %v1082 = vmul.f32 %v1059, %v1071
  %v1083 = vmul.f32 %v1060, %v1071
  %v1084 = vmul.f32 %v1061, %v1071
  %v1085 = vmul.f32 %v1062, %v1071
  %v1086 = vmul.f32 %v1063, %v1071
  %v1087 = vmul.f32 %v1064, %v1071
  %v1088 = vmul.f32 %v1065, %v1071
  %v1089 = vld [vmem:[%s7] sm:$0x1]
  %v1091 = vlaneseq
  %v1092 = vshrl.u32 %v1091, 7
  %v1093 = vsub.s32 0, %v1092
  %v1094 = vrot.slane %v1089, %v1093
  %v1096 = vadd.f32 %v1073, %v1094
  %v1097 = vadd.f32 %v1074, %v1094
  %v1098 = vadd.f32 %v1075, %v1094
  %v1099 = vadd.f32 %v1076, %v1094
  %v1100 = vadd.f32 %v1077, %v1094
  %v1101 = vadd.f32 %v1078, %v1094
  %v1102 = vadd.f32 %v1079, %v1094
  %v1103 = vadd.f32 %v1080, %v1094
  %v1104 = vadd.f32 %v1081, %v1094
  %v1105 = vadd.f32 %v1082, %v1094
  %v1106 = vadd.f32 %v1083, %v1094
  %v1107 = vadd.f32 %v1084, %v1094
  %v1108 = vadd.f32 %v1085, %v1094
  %v1109 = vadd.f32 %v1086, %v1094
  %v1110 = vadd.f32 %v1087, %v1094
  %v1111 = vadd.f32 %v1088, %v1094
  %v1112 = vmax.f32 %v1096, 0.0
  %v1113 = vmax.f32 %v1097, 0.0
  %v1114 = vmax.f32 %v1098, 0.0
  %v1115 = vmax.f32 %v1099, 0.0
  %v1116 = vmax.f32 %v1100, 0.0
  %v1117 = vmax.f32 %v1101, 0.0
  %v1118 = vmax.f32 %v1102, 0.0
  %v1119 = vmax.f32 %v1103, 0.0
  %v1120 = vmax.f32 %v1104, 0.0
  %v1121 = vmax.f32 %v1105, 0.0
  %v1122 = vmax.f32 %v1106, 0.0
  %v1123 = vmax.f32 %v1107, 0.0
  %v1124 = vmax.f32 %v1108, 0.0
  %v1125 = vmax.f32 %v1109, 0.0
  %v1126 = vmax.f32 %v1110, 0.0
  %v1127 = vmax.f32 %v1111, 0.0
  %1128 = vmatprep.subr.mxu0 0.0
  %1129 = vmatpush1.msra.mxu0 %v1127
  %1130 = vmatprep.subr.mxu0 0.0
  %1131 = vmatpush1.msra.mxu0 %v1126
  %1132 = vmatprep.subr.mxu0 0.0
  %1133 = vmatpush1.msra.mxu0 %v1125
  %1134 = vmatprep.subr.mxu0 0.0
  %1135 = vmatpush1.msra.mxu0 %v1124
  %1136 = vmatprep.subr.mxu0 0.0
  %1137 = vmatpush1.msra.mxu0 %v1123
  %1138 = vmatprep.subr.mxu0 0.0
  %1139 = vmatpush1.msra.mxu0 %v1122
  %1140 = vmatprep.subr.mxu0 0.0
  %1141 = vmatpush1.msra.mxu0 %v1121
  %1142 = vmatprep.subr.mxu0 0.0
  %1143 = vmatpush1.msra.mxu0 %v1120
  %1144 = vmatprep.subr.mxu0 0.0
  %1145 = vmatpush1.msra.mxu0 %v1119
  %1146 = vmatprep.subr.mxu0 0.0
  %1147 = vmatpush1.msra.mxu0 %v1118
  %1148 = vmatprep.subr.mxu0 0.0
  %1149 = vmatpush1.msra.mxu0 %v1117
  %1150 = vmatprep.subr.mxu0 0.0
  %1151 = vmatpush1.msra.mxu0 %v1116
  %1152 = vmatprep.subr.mxu0 0.0
  %1153 = vmatpush1.msra.mxu0 %v1115
  %1154 = vmatprep.subr.mxu0 0.0
  %1155 = vmatpush1.msra.mxu0 %v1114
  %1156 = vmatprep.subr.mxu0 0.0
  %1157 = vmatpush1.msra.mxu0 %v1113
  %1158 = vmatprep.subr.mxu0 0.0
  %1159 = vmatpush1.msra.mxu0 %v1112
  %1160 = vmatprep.subr.mxu0 0.0
  %1161 = vmatpush2.msra.mxu0 0.0
  %1162 = vmatprep.subr.mxu0 0.0
  %1163 = vmatpush2.msra.mxu0 0.0
  %1164 = vmatprep.subr.mxu0 0.0
  %1165 = vmatpush2.msra.mxu0 0.0
  %1166 = vmatprep.subr.mxu0 0.0
  %1167 = vmatpush2.msra.mxu0 0.0
  %1168 = vmatprep.subr.mxu0 0.0
  %1169 = vmatpush2.msra.mxu0 0.0
  %1170 = vmatprep.subr.mxu0 0.0
  %1171 = vmatpush2.msra.mxu0 0.0
  %1172 = vmatprep.subr.mxu0 0.0
  %1173 = vmatpush2.msra.mxu0 0.0
  %1174 = vmatprep.subr.mxu0 0.0
  %1175 = vmatpush2.msra.mxu0 0.0
  %1176 = vmatprep.subr.mxu0 0.0
  %1177 = vmatpush2.msra.mxu0 0.0
  %1178 = vmatprep.subr.mxu0 0.0
  %1179 = vmatpush2.msra.mxu0 0.0
  %1180 = vmatprep.subr.mxu0 0.0
  %1181 = vmatpush2.msra.mxu0 0.0
  %1182 = vmatprep.subr.mxu0 0.0
  %1183 = vmatpush2.msra.mxu0 0.0
  %1184 = vmatprep.subr.mxu0 0.0
  %1185 = vmatpush2.msra.mxu0 0.0
  %1186 = vmatprep.subr.mxu0 0.0
  %1187 = vmatpush2.msra.mxu0 0.0
  %1188 = vmatprep.subr.mxu0 0.0
  %1189 = vmatpush2.msra.mxu0 0.0
  %1190 = vmatprep.subr.mxu0 0.0
  %1191 = vmatpush2.msra.mxu0 0.0
  %1192 = vmatprep.mubr.f32.mxu0 0.0
  %1193 = vmatmul.mubr.f32.gmra.mxu0 %v52
  %v1194 = vpop.f32.mrf.mxu0
  %v1195 = vadd.f32 0.0, %v1194
  %v1196 = vpop.f32.mrf.mxu0
  %1197 = vmatprep.mubr.f32.mxu0 0.0
  %1198 = vmatmul.mubr.f32.gmra.mxu0 %v53
  %v1199 = vpop.f32.mrf.mxu0
  %v1200 = vadd.f32 0.0, %v1199
  %v1201 = vpop.f32.mrf.mxu0
  %1202 = vmatprep.mubr.f32.mxu0 0.0
  %1203 = vmatmul.mubr.f32.gmra.mxu0 %v54
  %v1204 = vpop.f32.mrf.mxu0
  %v1205 = vadd.f32 0.0, %v1204
  %v1206 = vpop.f32.mrf.mxu0
  %1207 = vmatprep.mubr.f32.mxu0 0.0
  %1208 = vmatmul.mubr.f32.gmra.mxu0 %v55
  %v1209 = vpop.f32.mrf.mxu0
  %v1210 = vadd.f32 0.0, %v1209
  %v1211 = vpop.f32.mrf.mxu0
  %1212 = vmatprep.mubr.f32.mxu0 0.0
  %1213 = vmatmul.mubr.f32.gmra.mxu0 %v56
  %v1214 = vpop.f32.mrf.mxu0
  %v1215 = vadd.f32 0.0, %v1214
  %v1216 = vpop.f32.mrf.mxu0
  %1217 = vmatprep.mubr.f32.mxu0 0.0
  %1218 = vmatmul.mubr.f32.gmra.mxu0 %v57
  %v1219 = vpop.f32.mrf.mxu0
  %v1220 = vadd.f32 0.0, %v1219
  %v1221 = vpop.f32.mrf.mxu0
  %1222 = vmatprep.mubr.f32.mxu0 0.0
  %1223 = vmatmul.mubr.f32.gmra.mxu0 %v58
  %v1224 = vpop.f32.mrf.mxu0
  %v1225 = vadd.f32 0.0, %v1224
  %v1226 = vpop.f32.mrf.mxu0
  %1227 = vmatprep.mubr.f32.mxu0 0.0
  %1228 = vmatmul.mubr.f32.gmra.mxu0 %v59
  %v1229 = vpop.f32.mrf.mxu0
  %v1230 = vadd.f32 0.0, %v1229
  %v1231 = vpop.f32.mrf.mxu0
  %1232 = vmatprep.mubr.f32.mxu0 0.0
  %1233 = vmatmul.mubr.f32.gmra.mxu0 %v60
  %v1234 = vpop.f32.mrf.mxu0
  %v1235 = vadd.f32 0.0, %v1234
  %v1236 = vpop.f32.mrf.mxu0
  %1237 = vmatprep.mubr.f32.mxu0 0.0
  %1238 = vmatmul.mubr.f32.gmra.mxu0 %v61
  %v1239 = vpop.f32.mrf.mxu0
  %v1240 = vadd.f32 0.0, %v1239
  %v1241 = vpop.f32.mrf.mxu0
  %1242 = vmatprep.mubr.f32.mxu0 0.0
  %1243 = vmatmul.mubr.f32.gmra.mxu0 %v62
  %v1244 = vpop.f32.mrf.mxu0
  %v1245 = vadd.f32 0.0, %v1244
  %v1246 = vpop.f32.mrf.mxu0
  %1247 = vmatprep.mubr.f32.mxu0 0.0
  %1248 = vmatmul.mubr.f32.gmra.mxu0 %v63
  %v1249 = vpop.f32.mrf.mxu0
  %v1250 = vadd.f32 0.0, %v1249
  %v1251 = vpop.f32.mrf.mxu0
  %1252 = vmatprep.mubr.f32.mxu0 0.0
  %1253 = vmatmul.mubr.f32.gmra.mxu0 %v64
  %v1254 = vpop.f32.mrf.mxu0
  %v1255 = vadd.f32 0.0, %v1254
  %v1256 = vpop.f32.mrf.mxu0
  %1257 = vmatprep.mubr.f32.mxu0 0.0
  %1258 = vmatmul.mubr.f32.gmra.mxu0 %v65
  %v1259 = vpop.f32.mrf.mxu0
  %v1260 = vadd.f32 0.0, %v1259
  %v1261 = vpop.f32.mrf.mxu0
  %1262 = vmatprep.mubr.f32.mxu0 0.0
  %1263 = vmatmul.mubr.f32.gmra.mxu0 %v66
  %v1264 = vpop.f32.mrf.mxu0
  %v1265 = vadd.f32 0.0, %v1264
  %v1266 = vpop.f32.mrf.mxu0
  %1267 = vmatprep.mubr.f32.mxu0 0.0
  %1268 = vmatmul.mubr.f32.gmra.mxu0 %v67
  %v1269 = vpop.f32.mrf.mxu0
  %v1270 = vadd.f32 0.0, %v1269
  %v1271 = vpop.f32.mrf.mxu0
  %1272 = vmatprep.mubr.f32.mxu0 0.0
  %1273 = vmatmul.mubr.f32.gmra.mxu0 %v68
  %v1274 = vpop.f32.mrf.mxu0
  %v1275 = vadd.f32 0.0, %v1274
  %v1276 = vpop.f32.mrf.mxu0
  %1277 = vmatprep.mubr.f32.mxu0 0.0
  %1278 = vmatmul.mubr.f32.gmra.mxu0 %v69
  %v1279 = vpop.f32.mrf.mxu0
  %v1280 = vadd.f32 0.0, %v1279
  %v1281 = vpop.f32.mrf.mxu0
  %1282 = vmatprep.mubr.f32.mxu0 0.0
  %1283 = vmatmul.mubr.f32.gmra.mxu0 %v70
  %v1284 = vpop.f32.mrf.mxu0
  %v1285 = vadd.f32 0.0, %v1284
  %v1286 = vpop.f32.mrf.mxu0
  %1287 = vmatprep.mubr.f32.mxu0 0.0
  %1288 = vmatmul.mubr.f32.gmra.mxu0 %v71
  %v1289 = vpop.f32.mrf.mxu0
  %v1290 = vadd.f32 0.0, %v1289
  %v1291 = vpop.f32.mrf.mxu0
  %1292 = vmatprep.mubr.f32.mxu0 0.0
  %1293 = vmatmul.mubr.f32.gmra.mxu0 %v72
  %v1294 = vpop.f32.mrf.mxu0
  %v1295 = vadd.f32 0.0, %v1294
  %v1296 = vpop.f32.mrf.mxu0
  %1297 = vmatprep.mubr.f32.mxu0 0.0
  %1298 = vmatmul.mubr.f32.gmra.mxu0 %v73
  %v1299 = vpop.f32.mrf.mxu0
  %v1300 = vadd.f32 0.0, %v1299
  %v1301 = vpop.f32.mrf.mxu0
  %1302 = vmatprep.mubr.f32.mxu0 0.0
  %1303 = vmatmul.mubr.f32.gmra.mxu0 %v74
  %v1304 = vpop.f32.mrf.mxu0
  %v1305 = vadd.f32 0.0, %v1304
  %v1306 = vpop.f32.mrf.mxu0
  %1307 = vmatprep.mubr.f32.mxu0 0.0
  %1308 = vmatmul.mubr.f32.gmra.mxu0 %v75
  %v1309 = vpop.f32.mrf.mxu0
  %v1310 = vadd.f32 0.0, %v1309
  %v1311 = vpop.f32.mrf.mxu0
  %1312 = vmatprep.mubr.f32.mxu0 0.0
  %1313 = vmatmul.mubr.f32.gmra.mxu0 %v76
  %v1314 = vpop.f32.mrf.mxu0
  %v1315 = vadd.f32 0.0, %v1314
  %v1316 = vpop.f32.mrf.mxu0
  %1317 = vmatprep.mubr.f32.mxu0 0.0
  %1318 = vmatmul.mubr.f32.gmra.mxu0 %v77
  %v1319 = vpop.f32.mrf.mxu0
  %v1320 = vadd.f32 0.0, %v1319
  %v1321 = vpop.f32.mrf.mxu0
  %1322 = vmatprep.mubr.f32.mxu0 0.0
  %1323 = vmatmul.mubr.f32.gmra.mxu0 %v78
  %v1324 = vpop.f32.mrf.mxu0
  %v1325 = vadd.f32 0.0, %v1324
  %v1326 = vpop.f32.mrf.mxu0
  %1327 = vmatprep.mubr.f32.mxu0 0.0
  %1328 = vmatmul.mubr.f32.gmra.mxu0 %v79
  %v1329 = vpop.f32.mrf.mxu0
  %v1330 = vadd.f32 0.0, %v1329
  %v1331 = vpop.f32.mrf.mxu0
  %1332 = vmatprep.mubr.f32.mxu0 0.0
  %1333 = vmatmul.mubr.f32.gmra.mxu0 %v80
  %v1334 = vpop.f32.mrf.mxu0
  %v1335 = vadd.f32 0.0, %v1334
  %v1336 = vpop.f32.mrf.mxu0
  %1337 = vmatprep.mubr.f32.mxu0 0.0
  %1338 = vmatmul.mubr.f32.gmra.mxu0 %v81
  %v1339 = vpop.f32.mrf.mxu0
  %v1340 = vadd.f32 0.0, %v1339
  %v1341 = vpop.f32.mrf.mxu0
  %1342 = vmatprep.mubr.f32.mxu0 0.0
  %1343 = vmatmul.mubr.f32.gmra.mxu0 %v82
  %v1344 = vpop.f32.mrf.mxu0
  %v1345 = vadd.f32 0.0, %v1344
  %v1346 = vpop.f32.mrf.mxu0
  %1347 = vmatprep.mubr.f32.mxu0 0.0
  %1348 = vmatmul.mubr.f32.gmra.mxu0 %v83
  %v1349 = vpop.f32.mrf.mxu0
  %v1350 = vadd.f32 0.0, %v1349
  %v1351 = vpop.f32.mrf.mxu0
  %1352 = vmatprep.mubr.f32.mxu0 0.0
  %1353 = vmatmul.mubr.f32.gmra.mxu0 %v84
  %v1354 = vpop.f32.mrf.mxu0
  %v1355 = vadd.f32 0.0, %v1354
  %v1356 = vpop.f32.mrf.mxu0
  %1357 = vmatprep.mubr.f32.mxu0 0.0
  %1358 = vmatmul.mubr.f32.gmra.mxu0 %v85
  %v1359 = vpop.f32.mrf.mxu0
  %v1360 = vadd.f32 0.0, %v1359
  %v1361 = vpop.f32.mrf.mxu0
  %1362 = vmatprep.mubr.f32.mxu0 0.0
  %1363 = vmatmul.mubr.f32.gmra.mxu0 %v86
  %v1364 = vpop.f32.mrf.mxu0
  %v1365 = vadd.f32 0.0, %v1364
  %v1366 = vpop.f32.mrf.mxu0
  %1367 = vmatprep.mubr.f32.mxu0 0.0
  %1368 = vmatmul.mubr.f32.gmra.mxu0 %v87
  %v1369 = vpop.f32.mrf.mxu0
  %v1370 = vadd.f32 0.0, %v1369
  %v1371 = vpop.f32.mrf.mxu0
  %1372 = vmatprep.mubr.f32.mxu0 0.0
  %1373 = vmatmul.mubr.f32.gmra.mxu0 %v88
  %v1374 = vpop.f32.mrf.mxu0
  %v1375 = vadd.f32 0.0, %v1374
  %v1376 = vpop.f32.mrf.mxu0
  %1377 = vmatprep.mubr.f32.mxu0 0.0
  %1378 = vmatmul.mubr.f32.gmra.mxu0 %v89
  %v1379 = vpop.f32.mrf.mxu0
  %v1380 = vadd.f32 0.0, %v1379
  %v1381 = vpop.f32.mrf.mxu0
  %1382 = vmatprep.mubr.f32.mxu0 0.0
  %1383 = vmatmul.mubr.f32.gmra.mxu0 %v90
  %v1384 = vpop.f32.mrf.mxu0
  %v1385 = vadd.f32 0.0, %v1384
  %v1386 = vpop.f32.mrf.mxu0
  %1387 = vmatprep.mubr.f32.mxu0 0.0
  %1388 = vmatmul.mubr.f32.gmra.mxu0 %v91
  %v1389 = vpop.f32.mrf.mxu0
  %v1390 = vadd.f32 0.0, %v1389
  %v1391 = vpop.f32.mrf.mxu0
  %1392 = vmatprep.mubr.f32.mxu0 0.0
  %1393 = vmatmul.mubr.f32.gmra.mxu0 %v92
  %v1394 = vpop.f32.mrf.mxu0
  %v1395 = vadd.f32 0.0, %v1394
  %v1396 = vpop.f32.mrf.mxu0
  %1397 = vmatprep.mubr.f32.mxu0 0.0
  %1398 = vmatmul.mubr.f32.gmra.mxu0 %v93
  %v1399 = vpop.f32.mrf.mxu0
  %v1400 = vadd.f32 0.0, %v1399
  %v1401 = vpop.f32.mrf.mxu0
  %1402 = vmatprep.mubr.f32.mxu0 0.0
  %1403 = vmatmul.mubr.f32.gmra.mxu0 %v94
  %v1404 = vpop.f32.mrf.mxu0
  %v1405 = vadd.f32 0.0, %v1404
  %v1406 = vpop.f32.mrf.mxu0
  %1407 = vmatprep.mubr.f32.mxu0 0.0
  %1408 = vmatmul.mubr.f32.gmra.mxu0 %v95
  %v1409 = vpop.f32.mrf.mxu0
  %v1410 = vadd.f32 0.0, %v1409
  %v1411 = vpop.f32.mrf.mxu0
  %1412 = vmatprep.mubr.f32.mxu0 0.0
  %1413 = vmatmul.mubr.f32.gmra.mxu0 %v96
  %v1414 = vpop.f32.mrf.mxu0
  %v1415 = vadd.f32 0.0, %v1414
  %v1416 = vpop.f32.mrf.mxu0
  %1417 = vmatprep.mubr.f32.mxu0 0.0
  %1418 = vmatmul.mubr.f32.gmra.mxu0 %v97
  %v1419 = vpop.f32.mrf.mxu0
  %v1420 = vadd.f32 0.0, %v1419
  %v1421 = vpop.f32.mrf.mxu0
  %1422 = vmatprep.mubr.f32.mxu0 0.0
  %1423 = vmatmul.mubr.f32.gmra.mxu0 %v98
  %v1424 = vpop.f32.mrf.mxu0
  %v1425 = vadd.f32 0.0, %v1424
  %v1426 = vpop.f32.mrf.mxu0
  %1427 = vmatprep.mubr.f32.mxu0 0.0
  %1428 = vmatmul.mubr.f32.gmra.mxu0 %v99
  %v1429 = vpop.f32.mrf.mxu0
  %v1430 = vadd.f32 0.0, %v1429
  %v1431 = vpop.f32.mrf.mxu0
  %1432 = vdwg.mxu0
  %1433 = vrot.lane.b32.xlu0 %v1275, 32
  %v1434 = vpop.permute.xlu0 %1433
  %1435 = vrot.lane.b32.xlu0 %v1280, 32
  %v1436 = vpop.permute.xlu0 %1435
  %1437 = vrot.lane.b32.xlu0 %v1285, 32
  %v1438 = vpop.permute.xlu0 %1437
  %1439 = vrot.lane.b32.xlu0 %v1290, 32
  %v1440 = vpop.permute.xlu0 %1439
  %1441 = vrot.lane.b32.xlu0 %v1295, 32
  %v1442 = vpop.permute.xlu0 %1441
  %1443 = vrot.lane.b32.xlu0 %v1300, 32
  %v1444 = vpop.permute.xlu0 %1443
  %1445 = vrot.lane.b32.xlu0 %v1305, 32
  %v1446 = vpop.permute.xlu0 %1445
  %1447 = vrot.lane.b32.xlu0 %v1310, 32
  %v1448 = vpop.permute.xlu0 %1447
  %1449 = vrot.lane.b32.xlu0 %v1315, 32
  %v1450 = vpop.permute.xlu0 %1449
  %1451 = vrot.lane.b32.xlu0 %v1320, 32
  %v1452 = vpop.permute.xlu0 %1451
  %1453 = vrot.lane.b32.xlu0 %v1325, 32
  %v1454 = vpop.permute.xlu0 %1453
  %1455 = vrot.lane.b32.xlu0 %v1330, 32
  %v1456 = vpop.permute.xlu0 %1455
  %1457 = vrot.lane.b32.xlu0 %v1335, 32
  %v1458 = vpop.permute.xlu0 %1457
  %1459 = vrot.lane.b32.xlu0 %v1340, 32
  %v1460 = vpop.permute.xlu0 %1459
  %1461 = vrot.lane.b32.xlu0 %v1345, 32
  %v1462 = vpop.permute.xlu0 %1461
  %1463 = vrot.lane.b32.xlu0 %v1350, 32
  %v1464 = vpop.permute.xlu0 %1463
  %v1465 = vadd.f32 %v1195, %v1434
  %v1466 = vadd.f32 %v1200, %v1436
  %v1467 = vadd.f32 %v1205, %v1438
  %v1468 = vadd.f32 %v1210, %v1440
  %v1469 = vadd.f32 %v1215, %v1442
  %v1470 = vadd.f32 %v1220, %v1444
  %v1471 = vadd.f32 %v1225, %v1446
  %v1472 = vadd.f32 %v1230, %v1448
  %v1473 = vadd.f32 %v1235, %v1450
  %v1474 = vadd.f32 %v1240, %v1452
  %v1475 = vadd.f32 %v1245, %v1454
  %v1476 = vadd.f32 %v1250, %v1456
  %v1477 = vadd.f32 %v1255, %v1458
  %v1478 = vadd.f32 %v1260, %v1460
  %v1479 = vadd.f32 %v1265, %v1462
  %v1480 = vadd.f32 %v1270, %v1464
  %1481 = vrot.lane.b32.xlu0 %v1355, 64
  %v1482 = vpop.permute.xlu0 %1481
  %1483 = vrot.lane.b32.xlu0 %v1360, 64
  %v1484 = vpop.permute.xlu0 %1483
  %1485 = vrot.lane.b32.xlu0 %v1365, 64
  %v1486 = vpop.permute.xlu0 %1485
  %1487 = vrot.lane.b32.xlu0 %v1370, 64
  %v1488 = vpop.permute.xlu0 %1487
  %1489 = vrot.lane.b32.xlu0 %v1375, 64
  %v1490 = vpop.permute.xlu0 %1489
  %1491 = vrot.lane.b32.xlu0 %v1380, 64
  %v1492 = vpop.permute.xlu0 %1491
  %1493 = vrot.lane.b32.xlu0 %v1385, 64
  %v1494 = vpop.permute.xlu0 %1493
  %1495 = vrot.lane.b32.xlu0 %v1390, 64
  %v1496 = vpop.permute.xlu0 %1495
  %1497 = vrot.lane.b32.xlu0 %v1395, 64
  %v1498 = vpop.permute.xlu0 %1497
  %1499 = vrot.lane.b32.xlu0 %v1400, 64
  %v1500 = vpop.permute.xlu0 %1499
  %1501 = vrot.lane.b32.xlu0 %v1405, 64
  %v1502 = vpop.permute.xlu0 %1501
  %1503 = vrot.lane.b32.xlu0 %v1410, 64
  %v1504 = vpop.permute.xlu0 %1503
  %1505 = vrot.lane.b32.xlu0 %v1415, 64
  %v1506 = vpop.permute.xlu0 %1505
  %1507 = vrot.lane.b32.xlu0 %v1420, 64
  %v1508 = vpop.permute.xlu0 %1507
  %1509 = vrot.lane.b32.xlu0 %v1425, 64
  %v1510 = vpop.permute.xlu0 %1509
  %1511 = vrot.lane.b32.xlu0 %v1430, 64
  %v1512 = vpop.permute.xlu0 %1511
  %v1513 = vadd.f32 %v1465, %v1482
  %v1514 = vadd.f32 %v1466, %v1484
  %v1515 = vadd.f32 %v1467, %v1486
  %v1516 = vadd.f32 %v1468, %v1488
  %v1517 = vadd.f32 %v1469, %v1490
  %v1518 = vadd.f32 %v1470, %v1492
  %v1519 = vadd.f32 %v1471, %v1494
  %v1520 = vadd.f32 %v1472, %v1496
  %v1521 = vadd.f32 %v1473, %v1498
  %v1522 = vadd.f32 %v1474, %v1500
  %v1523 = vadd.f32 %v1475, %v1502
  %v1524 = vadd.f32 %v1476, %v1504
  %v1525 = vadd.f32 %v1477, %v1506
  %v1526 = vadd.f32 %v1478, %v1508
  %v1527 = vadd.f32 %v1479, %v1510
  %v1528 = vadd.f32 %v1480, %v1512
  %s1529 = scalar_lea.vmem %s3, 128
  %v1530 = vld [vmem:[%s1529] sm:$0xff]
  %v1531 = vld [vmem:[%s1529 + $0x8] sm:$0xff]
  %v1532 = vld [vmem:[%s1529 + $0x10] sm:$0xff]
  %v1533 = vld [vmem:[%s1529 + $0x18] sm:$0xff]
  %v1534 = vld [vmem:[%s1529 + $0x20] sm:$0xff]
  %v1535 = vld [vmem:[%s1529 + $0x28] sm:$0xff]
  %v1536 = vld [vmem:[%s1529 + $0x30] sm:$0xff]
  %v1537 = vld [vmem:[%s1529 + $0x38] sm:$0xff]
  %v1538 = vld [vmem:[%s1529 + $0x40] sm:$0xff]
  %v1539 = vld [vmem:[%s1529 + $0x48] sm:$0xff]
  %v1540 = vld [vmem:[%s1529 + $0x50] sm:$0xff]
  %v1541 = vld [vmem:[%s1529 + $0x58] sm:$0xff]
  %v1542 = vld [vmem:[%s1529 + $0x60] sm:$0xff]
  %v1543 = vld [vmem:[%s1529 + $0x68] sm:$0xff]
  %v1544 = vld [vmem:[%s1529 + $0x70] sm:$0xff]
  %v1545 = vld [vmem:[%s1529 + $0x78] sm:$0xff]
  %s1546 = scalar_lea.vmem %s4, 1
  %v1547 = vld [vmem:[%s1546] sm:$0x1]
  %v1549 = vlaneseq
  %v1550 = vshrl.u32 %v1549, 7
  %v1551 = vsub.s32 0, %v1550
  %v1552 = vrot.slane %v1547, %v1551
  %1554 = vmatprep.subr.mxu0 0.0
  %1555 = vmatpush1.msra.mxu0 %v1545
  %1556 = vmatprep.subr.mxu0 0.0
  %1557 = vmatpush1.msra.mxu0 %v1544
  %1558 = vmatprep.subr.mxu0 0.0
  %1559 = vmatpush1.msra.mxu0 %v1543
  %1560 = vmatprep.subr.mxu0 0.0
  %1561 = vmatpush1.msra.mxu0 %v1542
  %1562 = vmatprep.subr.mxu0 0.0
  %1563 = vmatpush1.msra.mxu0 %v1541
  %1564 = vmatprep.subr.mxu0 0.0
  %1565 = vmatpush1.msra.mxu0 %v1540
  %1566 = vmatprep.subr.mxu0 0.0
  %1567 = vmatpush1.msra.mxu0 %v1539
  %1568 = vmatprep.subr.mxu0 0.0
  %1569 = vmatpush1.msra.mxu0 %v1538
  %1570 = vmatprep.subr.mxu0 0.0
  %1571 = vmatpush1.msra.mxu0 %v1537
  %1572 = vmatprep.subr.mxu0 0.0
  %1573 = vmatpush1.msra.mxu0 %v1536
  %1574 = vmatprep.subr.mxu0 0.0
  %1575 = vmatpush1.msra.mxu0 %v1535
  %1576 = vmatprep.subr.mxu0 0.0
  %1577 = vmatpush1.msra.mxu0 %v1534
  %1578 = vmatprep.subr.mxu0 0.0
  %1579 = vmatpush1.msra.mxu0 %v1533
  %1580 = vmatprep.subr.mxu0 0.0
  %1581 = vmatpush1.msra.mxu0 %v1532
  %1582 = vmatprep.subr.mxu0 0.0
  %1583 = vmatpush1.msra.mxu0 %v1531
  %1584 = vmatprep.subr.mxu0 0.0
  %1585 = vmatpush1.msra.mxu0 %v1530
  %1586 = vmatprep.subr.mxu0 0.0
  %1587 = vmatpush2.msra.mxu0 0.0
  %1588 = vmatprep.subr.mxu0 0.0
  %1589 = vmatpush2.msra.mxu0 0.0
  %1590 = vmatprep.subr.mxu0 0.0
  %1591 = vmatpush2.msra.mxu0 0.0
  %1592 = vmatprep.subr.mxu0 0.0
  %1593 = vmatpush2.msra.mxu0 0.0
  %1594 = vmatprep.subr.mxu0 0.0
  %1595 = vmatpush2.msra.mxu0 0.0
  %1596 = vmatprep.subr.mxu0 0.0
  %1597 = vmatpush2.msra.mxu0 0.0
  %1598 = vmatprep.subr.mxu0 0.0
  %1599 = vmatpush2.msra.mxu0 0.0
  %1600 = vmatprep.subr.mxu0 0.0
  %1601 = vmatpush2.msra.mxu0 0.0
  %1602 = vmatprep.subr.mxu0 0.0
  %1603 = vmatpush2.msra.mxu0 0.0
  %1604 = vmatprep.subr.mxu0 0.0
  %1605 = vmatpush2.msra.mxu0 0.0
  %1606 = vmatprep.subr.mxu0 0.0
  %1607 = vmatpush2.msra.mxu0 0.0
  %1608 = vmatprep.subr.mxu0 0.0
  %1609 = vmatpush2.msra.mxu0 0.0
  %1610 = vmatprep.subr.mxu0 0.0
  %1611 = vmatpush2.msra.mxu0 0.0
  %1612 = vmatprep.subr.mxu0 0.0
  %1613 = vmatpush2.msra.mxu0 0.0
  %1614 = vmatprep.subr.mxu0 0.0
  %1615 = vmatpush2.msra.mxu0 0.0
  %1616 = vmatprep.subr.mxu0 0.0
  %1617 = vmatpush2.msra.mxu0 0.0
  %1618 = vmatprep.mubr.f32.mxu0 0.0
  %1619 = vmatmul.mubr.f32.gmra.mxu0 %v1513
  %v1620 = vpop.f32.mrf.mxu0
  %v1621 = vadd.f32 %v1552, %v1620
  %v1622 = vpop.f32.mrf.mxu0
  %1623 = vmatprep.mubr.f32.mxu0 0.0
  %1624 = vmatmul.mubr.f32.gmra.mxu0 %v1514
  %v1625 = vpop.f32.mrf.mxu0
  %v1626 = vadd.f32 %v1552, %v1625
  %v1627 = vpop.f32.mrf.mxu0
  %1628 = vmatprep.mubr.f32.mxu0 0.0
  %1629 = vmatmul.mubr.f32.gmra.mxu0 %v1515
  %v1630 = vpop.f32.mrf.mxu0
  %v1631 = vadd.f32 %v1552, %v1630
  %v1632 = vpop.f32.mrf.mxu0
  %1633 = vmatprep.mubr.f32.mxu0 0.0
  %1634 = vmatmul.mubr.f32.gmra.mxu0 %v1516
  %v1635 = vpop.f32.mrf.mxu0
  %v1636 = vadd.f32 %v1552, %v1635
  %v1637 = vpop.f32.mrf.mxu0
  %1638 = vmatprep.mubr.f32.mxu0 0.0
  %1639 = vmatmul.mubr.f32.gmra.mxu0 %v1517
  %v1640 = vpop.f32.mrf.mxu0
  %v1641 = vadd.f32 %v1552, %v1640
  %v1642 = vpop.f32.mrf.mxu0
  %1643 = vmatprep.mubr.f32.mxu0 0.0
  %1644 = vmatmul.mubr.f32.gmra.mxu0 %v1518
  %v1645 = vpop.f32.mrf.mxu0
  %v1646 = vadd.f32 %v1552, %v1645
  %v1647 = vpop.f32.mrf.mxu0
  %1648 = vmatprep.mubr.f32.mxu0 0.0
  %1649 = vmatmul.mubr.f32.gmra.mxu0 %v1519
  %v1650 = vpop.f32.mrf.mxu0
  %v1651 = vadd.f32 %v1552, %v1650
  %v1652 = vpop.f32.mrf.mxu0
  %1653 = vmatprep.mubr.f32.mxu0 0.0
  %1654 = vmatmul.mubr.f32.gmra.mxu0 %v1520
  %v1655 = vpop.f32.mrf.mxu0
  %v1656 = vadd.f32 %v1552, %v1655
  %v1657 = vpop.f32.mrf.mxu0
  %1658 = vmatprep.mubr.f32.mxu0 0.0
  %1659 = vmatmul.mubr.f32.gmra.mxu0 %v1521
  %v1660 = vpop.f32.mrf.mxu0
  %v1661 = vadd.f32 %v1552, %v1660
  %v1662 = vpop.f32.mrf.mxu0
  %1663 = vmatprep.mubr.f32.mxu0 0.0
  %1664 = vmatmul.mubr.f32.gmra.mxu0 %v1522
  %v1665 = vpop.f32.mrf.mxu0
  %v1666 = vadd.f32 %v1552, %v1665
  %v1667 = vpop.f32.mrf.mxu0
  %1668 = vmatprep.mubr.f32.mxu0 0.0
  %1669 = vmatmul.mubr.f32.gmra.mxu0 %v1523
  %v1670 = vpop.f32.mrf.mxu0
  %v1671 = vadd.f32 %v1552, %v1670
  %v1672 = vpop.f32.mrf.mxu0
  %1673 = vmatprep.mubr.f32.mxu0 0.0
  %1674 = vmatmul.mubr.f32.gmra.mxu0 %v1524
  %v1675 = vpop.f32.mrf.mxu0
  %v1676 = vadd.f32 %v1552, %v1675
  %v1677 = vpop.f32.mrf.mxu0
  %1678 = vmatprep.mubr.f32.mxu0 0.0
  %1679 = vmatmul.mubr.f32.gmra.mxu0 %v1525
  %v1680 = vpop.f32.mrf.mxu0
  %v1681 = vadd.f32 %v1552, %v1680
  %v1682 = vpop.f32.mrf.mxu0
  %1683 = vmatprep.mubr.f32.mxu0 0.0
  %1684 = vmatmul.mubr.f32.gmra.mxu0 %v1526
  %v1685 = vpop.f32.mrf.mxu0
  %v1686 = vadd.f32 %v1552, %v1685
  %v1687 = vpop.f32.mrf.mxu0
  %1688 = vmatprep.mubr.f32.mxu0 0.0
  %1689 = vmatmul.mubr.f32.gmra.mxu0 %v1527
  %v1690 = vpop.f32.mrf.mxu0
  %v1691 = vadd.f32 %v1552, %v1690
  %v1692 = vpop.f32.mrf.mxu0
  %1693 = vmatprep.mubr.f32.mxu0 0.0
  %1694 = vmatmul.mubr.f32.gmra.mxu0 %v1528
  %v1695 = vpop.f32.mrf.mxu0
  %v1696 = vadd.f32 %v1552, %v1695
  %v1697 = vpop.f32.mrf.mxu0
  %1698 = vdwg.mxu0
  %v1699 = vmul.f32 %v1621, %v673
  %v1700 = vmul.f32 %v1626, %v673
  %v1701 = vmul.f32 %v1631, %v673
  %v1702 = vmul.f32 %v1636, %v673
  %v1703 = vmul.f32 %v1641, %v673
  %v1704 = vmul.f32 %v1646, %v673
  %v1705 = vmul.f32 %v1651, %v673
  %v1706 = vmul.f32 %v1656, %v673
  %v1707 = vmul.f32 %v1661, %v673
  %v1708 = vmul.f32 %v1666, %v673
  %v1709 = vmul.f32 %v1671, %v673
  %v1710 = vmul.f32 %v1676, %v673
  %v1711 = vmul.f32 %v1681, %v673
  %v1712 = vmul.f32 %v1686, %v673
  %v1713 = vmul.f32 %v1691, %v673
  %v1714 = vmul.f32 %v1696, %v673
  %1715 = vadd.xlane.f32.xlu0 %v1699
  %v1716 = vpop.xlane.xlu0 %1715
  %1717 = vadd.xlane.f32.xlu0 %v1700
  %v1718 = vpop.xlane.xlu0 %1717
  %1719 = vadd.xlane.f32.xlu0 %v1701
  %v1720 = vpop.xlane.xlu0 %1719
  %1721 = vadd.xlane.f32.xlu0 %v1702
  %v1722 = vpop.xlane.xlu0 %1721
  %1723 = vadd.xlane.f32.xlu0 %v1703
  %v1724 = vpop.xlane.xlu0 %1723
  %1725 = vadd.xlane.f32.xlu0 %v1704
  %v1726 = vpop.xlane.xlu0 %1725
  %1727 = vadd.xlane.f32.xlu0 %v1705
  %v1728 = vpop.xlane.xlu0 %1727
  %1729 = vadd.xlane.f32.xlu0 %v1706
  %v1730 = vpop.xlane.xlu0 %1729
  %1731 = vadd.xlane.f32.xlu0 %v1707
  %v1732 = vpop.xlane.xlu0 %1731
  %1733 = vadd.xlane.f32.xlu0 %v1708
  %v1734 = vpop.xlane.xlu0 %1733
  %1735 = vadd.xlane.f32.xlu0 %v1709
  %v1736 = vpop.xlane.xlu0 %1735
  %1737 = vadd.xlane.f32.xlu0 %v1710
  %v1738 = vpop.xlane.xlu0 %1737
  %1739 = vadd.xlane.f32.xlu0 %v1711
  %v1740 = vpop.xlane.xlu0 %1739
  %1741 = vadd.xlane.f32.xlu0 %v1712
  %v1742 = vpop.xlane.xlu0 %1741
  %1743 = vadd.xlane.f32.xlu0 %v1713
  %v1744 = vpop.xlane.xlu0 %1743
  %1745 = vadd.xlane.f32.xlu0 %v1714
  %v1746 = vpop.xlane.xlu0 %1745
  %v1747 = vadd.f32 %v1716, %v723
  %v1748 = vadd.f32 %v1718, %v723
  %v1749 = vadd.f32 %v1720, %v723
  %v1750 = vadd.f32 %v1722, %v723
  %v1751 = vadd.f32 %v1724, %v723
  %v1752 = vadd.f32 %v1726, %v723
  %v1753 = vadd.f32 %v1728, %v723
  %v1754 = vadd.f32 %v1730, %v723
  %v1755 = vadd.f32 %v1732, %v723
  %v1756 = vadd.f32 %v1734, %v723
  %v1757 = vadd.f32 %v1736, %v723
  %v1758 = vadd.f32 %v1738, %v723
  %v1759 = vadd.f32 %v1740, %v723
  %v1760 = vadd.f32 %v1742, %v723
  %v1761 = vadd.f32 %v1744, %v723
  %v1762 = vadd.f32 %v1746, %v723
  %v1763 = vxor.u32 %v1747, 2147483648
  %v1764 = vxor.u32 %v1748, 2147483648
  %v1765 = vxor.u32 %v1749, 2147483648
  %v1766 = vxor.u32 %v1750, 2147483648
  %v1767 = vxor.u32 %v1751, 2147483648
  %v1768 = vxor.u32 %v1752, 2147483648
  %v1769 = vxor.u32 %v1753, 2147483648
  %v1770 = vxor.u32 %v1754, 2147483648
  %v1771 = vxor.u32 %v1755, 2147483648
  %v1772 = vxor.u32 %v1756, 2147483648
  %v1773 = vxor.u32 %v1757, 2147483648
  %v1774 = vxor.u32 %v1758, 2147483648
  %v1775 = vxor.u32 %v1759, 2147483648
  %v1776 = vxor.u32 %v1760, 2147483648
  %v1777 = vxor.u32 %v1761, 2147483648
  %v1778 = vxor.u32 %v1762, 2147483648
  %v1779 = vmul.f32 %v1763, 1.442695
  %v1780 = vpow.pop %v1779
  %v1781 = vmul.f32 %v1764, 1.442695
  %v1782 = vpow.pop %v1781
  %v1783 = vmul.f32 %v1765, 1.442695
  %v1784 = vpow.pop %v1783
  %v1785 = vmul.f32 %v1766, 1.442695
  %v1786 = vpow.pop %v1785
  %v1787 = vmul.f32 %v1767, 1.442695
  %v1788 = vpow.pop %v1787
  %v1789 = vmul.f32 %v1768, 1.442695
  %v1790 = vpow.pop %v1789
  %v1791 = vmul.f32 %v1769, 1.442695
  %v1792 = vpow.pop %v1791
  %v1793 = vmul.f32 %v1770, 1.442695
  %v1794 = vpow.pop %v1793
  %v1795 = vmul.f32 %v1771, 1.442695
  %v1796 = vpow.pop %v1795
  %v1797 = vmul.f32 %v1772, 1.442695
  %v1798 = vpow.pop %v1797
  %v1799 = vmul.f32 %v1773, 1.442695
  %v1800 = vpow.pop %v1799
  %v1801 = vmul.f32 %v1774, 1.442695
  %v1802 = vpow.pop %v1801
  %v1803 = vmul.f32 %v1775, 1.442695
  %v1804 = vpow.pop %v1803
  %v1805 = vmul.f32 %v1776, 1.442695
  %v1806 = vpow.pop %v1805
  %v1807 = vmul.f32 %v1777, 1.442695
  %v1808 = vpow.pop %v1807
  %v1809 = vmul.f32 %v1778, 1.442695
  %v1810 = vpow.pop %v1809
  %v1811 = vadd.f32 %v1780, 1.0
  %v1812 = vadd.f32 %v1782, 1.0
  %v1813 = vadd.f32 %v1784, 1.0
  %v1814 = vadd.f32 %v1786, 1.0
  %v1815 = vadd.f32 %v1788, 1.0
  %v1816 = vadd.f32 %v1790, 1.0
  %v1817 = vadd.f32 %v1792, 1.0
  %v1818 = vadd.f32 %v1794, 1.0
  %v1819 = vadd.f32 %v1796, 1.0
  %v1820 = vadd.f32 %v1798, 1.0
  %v1821 = vadd.f32 %v1800, 1.0
  %v1822 = vadd.f32 %v1802, 1.0
  %v1823 = vadd.f32 %v1804, 1.0
  %v1824 = vadd.f32 %v1806, 1.0
  %v1825 = vadd.f32 %v1808, 1.0
  %v1826 = vadd.f32 %v1810, 1.0
  %v1827 = vrcp.pop %v1811
  %v1828 = vmul.f32 1.0, %v1827
  %v1829 = vrcp.pop %v1812
  %v1830 = vmul.f32 1.0, %v1829
  %v1831 = vrcp.pop %v1813
  %v1832 = vmul.f32 1.0, %v1831
  %v1833 = vrcp.pop %v1814
  %v1834 = vmul.f32 1.0, %v1833
  %v1835 = vrcp.pop %v1815
  %v1836 = vmul.f32 1.0, %v1835
  %v1837 = vrcp.pop %v1816
  %v1838 = vmul.f32 1.0, %v1837
  %v1839 = vrcp.pop %v1817
  %v1840 = vmul.f32 1.0, %v1839
  %v1841 = vrcp.pop %v1818
  %v1842 = vmul.f32 1.0, %v1841
  %v1843 = vrcp.pop %v1819
  %v1844 = vmul.f32 1.0, %v1843
  %v1845 = vrcp.pop %v1820
  %v1846 = vmul.f32 1.0, %v1845
  %v1847 = vrcp.pop %v1821
  %v1848 = vmul.f32 1.0, %v1847
  %v1849 = vrcp.pop %v1822
  %v1850 = vmul.f32 1.0, %v1849
  %v1851 = vrcp.pop %v1823
  %v1852 = vmul.f32 1.0, %v1851
  %v1853 = vrcp.pop %v1824
  %v1854 = vmul.f32 1.0, %v1853
  %v1855 = vrcp.pop %v1825
  %v1856 = vmul.f32 1.0, %v1855
  %v1857 = vrcp.pop %v1826
  %v1858 = vmul.f32 1.0, %v1857
  %v1859 = vmul.f32 %v1828, %v1621
  %v1860 = vmul.f32 %v1830, %v1626
  %v1861 = vmul.f32 %v1832, %v1631
  %v1862 = vmul.f32 %v1834, %v1636
  %v1863 = vmul.f32 %v1836, %v1641
  %v1864 = vmul.f32 %v1838, %v1646
  %v1865 = vmul.f32 %v1840, %v1651
  %v1866 = vmul.f32 %v1842, %v1656
  %v1867 = vmul.f32 %v1844, %v1661
  %v1868 = vmul.f32 %v1846, %v1666
  %v1869 = vmul.f32 %v1848, %v1671
  %v1870 = vmul.f32 %v1850, %v1676
  %v1871 = vmul.f32 %v1852, %v1681
  %v1872 = vmul.f32 %v1854, %v1686
  %v1873 = vmul.f32 %v1856, %v1691
  %v1874 = vmul.f32 %v1858, %v1696
  %v1875 = vadd.f32 %v1112, %v1859
  %v1876 = vadd.f32 %v1113, %v1860
  %v1877 = vadd.f32 %v1114, %v1861
  %v1878 = vadd.f32 %v1115, %v1862
  %v1879 = vadd.f32 %v1116, %v1863
  %v1880 = vadd.f32 %v1117, %v1864
  %v1881 = vadd.f32 %v1118, %v1865
  %v1882 = vadd.f32 %v1119, %v1866
  %v1883 = vadd.f32 %v1120, %v1867
  %v1884 = vadd.f32 %v1121, %v1868
  %v1885 = vadd.f32 %v1122, %v1869
  %v1886 = vadd.f32 %v1123, %v1870
  %v1887 = vadd.f32 %v1124, %v1871
  %v1888 = vadd.f32 %v1125, %v1872
  %v1889 = vadd.f32 %v1126, %v1873
  %v1890 = vadd.f32 %v1127, %v1874
  %1891 = vadd.xlane.f32.xlu0 %v1875
  %v1892 = vpop.xlane.xlu0 %1891
  %1893 = vadd.xlane.f32.xlu0 %v1876
  %v1894 = vpop.xlane.xlu0 %1893
  %1895 = vadd.xlane.f32.xlu0 %v1877
  %v1896 = vpop.xlane.xlu0 %1895
  %1897 = vadd.xlane.f32.xlu0 %v1878
  %v1898 = vpop.xlane.xlu0 %1897
  %1899 = vadd.xlane.f32.xlu0 %v1879
  %v1900 = vpop.xlane.xlu0 %1899
  %1901 = vadd.xlane.f32.xlu0 %v1880
  %v1902 = vpop.xlane.xlu0 %1901
  %1903 = vadd.xlane.f32.xlu0 %v1881
  %v1904 = vpop.xlane.xlu0 %1903
  %1905 = vadd.xlane.f32.xlu0 %v1882
  %v1906 = vpop.xlane.xlu0 %1905
  %1907 = vadd.xlane.f32.xlu0 %v1883
  %v1908 = vpop.xlane.xlu0 %1907
  %1909 = vadd.xlane.f32.xlu0 %v1884
  %v1910 = vpop.xlane.xlu0 %1909
  %1911 = vadd.xlane.f32.xlu0 %v1885
  %v1912 = vpop.xlane.xlu0 %1911
  %1913 = vadd.xlane.f32.xlu0 %v1886
  %v1914 = vpop.xlane.xlu0 %1913
  %1915 = vadd.xlane.f32.xlu0 %v1887
  %v1916 = vpop.xlane.xlu0 %1915
  %1917 = vadd.xlane.f32.xlu0 %v1888
  %v1918 = vpop.xlane.xlu0 %1917
  %1919 = vadd.xlane.f32.xlu0 %v1889
  %v1920 = vpop.xlane.xlu0 %1919
  %1921 = vadd.xlane.f32.xlu0 %v1890
  %v1922 = vpop.xlane.xlu0 %1921
  %v1923 = vmul.f32 %v1892, 0.03125
  %v1924 = vmul.f32 %v1894, 0.03125
  %v1925 = vmul.f32 %v1896, 0.03125
  %v1926 = vmul.f32 %v1898, 0.03125
  %v1927 = vmul.f32 %v1900, 0.03125
  %v1928 = vmul.f32 %v1902, 0.03125
  %v1929 = vmul.f32 %v1904, 0.03125
  %v1930 = vmul.f32 %v1906, 0.03125
  %v1931 = vmul.f32 %v1908, 0.03125
  %v1932 = vmul.f32 %v1910, 0.03125
  %v1933 = vmul.f32 %v1912, 0.03125
  %v1934 = vmul.f32 %v1914, 0.03125
  %v1935 = vmul.f32 %v1916, 0.03125
  %v1936 = vmul.f32 %v1918, 0.03125
  %v1937 = vmul.f32 %v1920, 0.03125
  %v1938 = vmul.f32 %v1922, 0.03125
  %v1939 = vsub.f32 %v1875, %v1923
  %v1940 = vsub.f32 %v1876, %v1924
  %v1941 = vsub.f32 %v1877, %v1925
  %v1942 = vsub.f32 %v1878, %v1926
  %v1943 = vsub.f32 %v1879, %v1927
  %v1944 = vsub.f32 %v1880, %v1928
  %v1945 = vsub.f32 %v1881, %v1929
  %v1946 = vsub.f32 %v1882, %v1930
  %v1947 = vsub.f32 %v1883, %v1931
  %v1948 = vsub.f32 %v1884, %v1932
  %v1949 = vsub.f32 %v1885, %v1933
  %v1950 = vsub.f32 %v1886, %v1934
  %v1951 = vsub.f32 %v1887, %v1935
  %v1952 = vsub.f32 %v1888, %v1936
  %v1953 = vsub.f32 %v1889, %v1937
  %v1954 = vsub.f32 %v1890, %v1938
  %v1955 = vmul.f32 %v1939, %v936
  %v1956 = vmul.f32 %v1940, %v936
  %v1957 = vmul.f32 %v1941, %v936
  %v1958 = vmul.f32 %v1942, %v936
  %v1959 = vmul.f32 %v1943, %v936
  %v1960 = vmul.f32 %v1944, %v936
  %v1961 = vmul.f32 %v1945, %v936
  %v1962 = vmul.f32 %v1946, %v936
  %v1963 = vmul.f32 %v1947, %v936
  %v1964 = vmul.f32 %v1948, %v936
  %v1965 = vmul.f32 %v1949, %v936
  %v1966 = vmul.f32 %v1950, %v936
  %v1967 = vmul.f32 %v1951, %v936
  %v1968 = vmul.f32 %v1952, %v936
  %v1969 = vmul.f32 %v1953, %v936
  %v1970 = vmul.f32 %v1954, %v936
  %v1971 = vmul.f32 %v1955, %v1955
  %v1972 = vmul.f32 %v1956, %v1956
  %v1973 = vmul.f32 %v1957, %v1957
  %v1974 = vmul.f32 %v1958, %v1958
  %v1975 = vmul.f32 %v1959, %v1959
  %v1976 = vmul.f32 %v1960, %v1960
  %v1977 = vmul.f32 %v1961, %v1961
  %v1978 = vmul.f32 %v1962, %v1962
  %v1979 = vmul.f32 %v1963, %v1963
  %v1980 = vmul.f32 %v1964, %v1964
  %v1981 = vmul.f32 %v1965, %v1965
  %v1982 = vmul.f32 %v1966, %v1966
  %v1983 = vmul.f32 %v1967, %v1967
  %v1984 = vmul.f32 %v1968, %v1968
  %v1985 = vmul.f32 %v1969, %v1969
  %v1986 = vmul.f32 %v1970, %v1970
  %1987 = vadd.xlane.f32.xlu0 %v1971
  %v1988 = vpop.xlane.xlu0 %1987
  %1989 = vadd.xlane.f32.xlu0 %v1972
  %v1990 = vpop.xlane.xlu0 %1989
  %1991 = vadd.xlane.f32.xlu0 %v1973
  %v1992 = vpop.xlane.xlu0 %1991
  %1993 = vadd.xlane.f32.xlu0 %v1974
  %v1994 = vpop.xlane.xlu0 %1993
  %1995 = vadd.xlane.f32.xlu0 %v1975
  %v1996 = vpop.xlane.xlu0 %1995
  %1997 = vadd.xlane.f32.xlu0 %v1976
  %v1998 = vpop.xlane.xlu0 %1997
  %1999 = vadd.xlane.f32.xlu0 %v1977
  %v2000 = vpop.xlane.xlu0 %1999
  %2001 = vadd.xlane.f32.xlu0 %v1978
  %v2002 = vpop.xlane.xlu0 %2001
  %2003 = vadd.xlane.f32.xlu0 %v1979
  %v2004 = vpop.xlane.xlu0 %2003
  %2005 = vadd.xlane.f32.xlu0 %v1980
  %v2006 = vpop.xlane.xlu0 %2005
  %2007 = vadd.xlane.f32.xlu0 %v1981
  %v2008 = vpop.xlane.xlu0 %2007
  %2009 = vadd.xlane.f32.xlu0 %v1982
  %v2010 = vpop.xlane.xlu0 %2009
  %2011 = vadd.xlane.f32.xlu0 %v1983
  %v2012 = vpop.xlane.xlu0 %2011
  %2013 = vadd.xlane.f32.xlu0 %v1984
  %v2014 = vpop.xlane.xlu0 %2013
  %2015 = vadd.xlane.f32.xlu0 %v1985
  %v2016 = vpop.xlane.xlu0 %2015
  %2017 = vadd.xlane.f32.xlu0 %v1986
  %v2018 = vpop.xlane.xlu0 %2017
  %v2019 = vmul.f32 %v1988, 0.03125
  %v2020 = vmul.f32 %v1990, 0.03125
  %v2021 = vmul.f32 %v1992, 0.03125
  %v2022 = vmul.f32 %v1994, 0.03125
  %v2023 = vmul.f32 %v1996, 0.03125
  %v2024 = vmul.f32 %v1998, 0.03125
  %v2025 = vmul.f32 %v2000, 0.03125
  %v2026 = vmul.f32 %v2002, 0.03125
  %v2027 = vmul.f32 %v2004, 0.03125
  %v2028 = vmul.f32 %v2006, 0.03125
  %v2029 = vmul.f32 %v2008, 0.03125
  %v2030 = vmul.f32 %v2010, 0.03125
  %v2031 = vmul.f32 %v2012, 0.03125
  %v2032 = vmul.f32 %v2014, 0.03125
  %v2033 = vmul.f32 %v2016, 0.03125
  %v2034 = vmul.f32 %v2018, 0.03125
  %v2035 = vadd.f32 %v2019, 1e-05
  %v2036 = vadd.f32 %v2020, 1e-05
  %v2037 = vadd.f32 %v2021, 1e-05
  %v2038 = vadd.f32 %v2022, 1e-05
  %v2039 = vadd.f32 %v2023, 1e-05
  %v2040 = vadd.f32 %v2024, 1e-05
  %v2041 = vadd.f32 %v2025, 1e-05
  %v2042 = vadd.f32 %v2026, 1e-05
  %v2043 = vadd.f32 %v2027, 1e-05
  %v2044 = vadd.f32 %v2028, 1e-05
  %v2045 = vadd.f32 %v2029, 1e-05
  %v2046 = vadd.f32 %v2030, 1e-05
  %v2047 = vadd.f32 %v2031, 1e-05
  %v2048 = vadd.f32 %v2032, 1e-05
  %v2049 = vadd.f32 %v2033, 1e-05
  %v2050 = vadd.f32 %v2034, 1e-05
  %v2051 = vrsqrt.pop %v2035
  %v2052 = vrsqrt.pop %v2036
  %v2053 = vrsqrt.pop %v2037
  %v2054 = vrsqrt.pop %v2038
  %v2055 = vrsqrt.pop %v2039
  %v2056 = vrsqrt.pop %v2040
  %v2057 = vrsqrt.pop %v2041
  %v2058 = vrsqrt.pop %v2042
  %v2059 = vrsqrt.pop %v2043
  %v2060 = vrsqrt.pop %v2044
  %v2061 = vrsqrt.pop %v2045
  %v2062 = vrsqrt.pop %v2046
  %v2063 = vrsqrt.pop %v2047
  %v2064 = vrsqrt.pop %v2048
  %v2065 = vrsqrt.pop %v2049
  %v2066 = vrsqrt.pop %v2050
  %v2067 = vmul.f32 %v1955, %v2051
  %v2068 = vmul.f32 %v1956, %v2052
  %v2069 = vmul.f32 %v1957, %v2053
  %v2070 = vmul.f32 %v1958, %v2054
  %v2071 = vmul.f32 %v1959, %v2055
  %v2072 = vmul.f32 %v1960, %v2056
  %v2073 = vmul.f32 %v1961, %v2057
  %v2074 = vmul.f32 %v1962, %v2058
  %v2075 = vmul.f32 %v1963, %v2059
  %v2076 = vmul.f32 %v1964, %v2060
  %v2077 = vmul.f32 %v1965, %v2061
  %v2078 = vmul.f32 %v1966, %v2062
  %v2079 = vmul.f32 %v1967, %v2063
  %v2080 = vmul.f32 %v1968, %v2064
  %v2081 = vmul.f32 %v1969, %v2065
  %v2082 = vmul.f32 %v1970, %v2066
  %s2083 = scalar_lea.vmem %s6, 1
  %v2084 = vld [vmem:[%s2083] sm:$0x1]
  %v2086 = vlaneseq
  %v2087 = vshrl.u32 %v2086, 7
  %v2088 = vsub.s32 0, %v2087
  %v2089 = vrot.slane %v2084, %v2088
  %v2091 = vmul.f32 %v2067, %v2089
  %v2092 = vmul.f32 %v2068, %v2089
  %v2093 = vmul.f32 %v2069, %v2089
  %v2094 = vmul.f32 %v2070, %v2089
  %v2095 = vmul.f32 %v2071, %v2089
  %v2096 = vmul.f32 %v2072, %v2089
  %v2097 = vmul.f32 %v2073, %v2089
  %v2098 = vmul.f32 %v2074, %v2089
  %v2099 = vmul.f32 %v2075, %v2089
  %v2100 = vmul.f32 %v2076, %v2089
  %v2101 = vmul.f32 %v2077, %v2089
  %v2102 = vmul.f32 %v2078, %v2089
  %v2103 = vmul.f32 %v2079, %v2089
  %v2104 = vmul.f32 %v2080, %v2089
  %v2105 = vmul.f32 %v2081, %v2089
  %v2106 = vmul.f32 %v2082, %v2089
  %s2107 = scalar_lea.vmem %s7, 1
  %v2108 = vld [vmem:[%s2107] sm:$0x1]
  %v2110 = vlaneseq
  %v2111 = vshrl.u32 %v2110, 7
  %v2112 = vsub.s32 0, %v2111
  %v2113 = vrot.slane %v2108, %v2112
  %v2115 = vadd.f32 %v2091, %v2113
  %v2116 = vadd.f32 %v2092, %v2113
  %v2117 = vadd.f32 %v2093, %v2113
  %v2118 = vadd.f32 %v2094, %v2113
  %v2119 = vadd.f32 %v2095, %v2113
  %v2120 = vadd.f32 %v2096, %v2113
  %v2121 = vadd.f32 %v2097, %v2113
  %v2122 = vadd.f32 %v2098, %v2113
  %v2123 = vadd.f32 %v2099, %v2113
  %v2124 = vadd.f32 %v2100, %v2113
  %v2125 = vadd.f32 %v2101, %v2113
  %v2126 = vadd.f32 %v2102, %v2113
  %v2127 = vadd.f32 %v2103, %v2113
  %v2128 = vadd.f32 %v2104, %v2113
  %v2129 = vadd.f32 %v2105, %v2113
  %v2130 = vadd.f32 %v2106, %v2113
  %v2131 = vmax.f32 %v2115, 0.0
  %v2132 = vmax.f32 %v2116, 0.0
  %v2133 = vmax.f32 %v2117, 0.0
  %v2134 = vmax.f32 %v2118, 0.0
  %v2135 = vmax.f32 %v2119, 0.0
  %v2136 = vmax.f32 %v2120, 0.0
  %v2137 = vmax.f32 %v2121, 0.0
  %v2138 = vmax.f32 %v2122, 0.0
  %v2139 = vmax.f32 %v2123, 0.0
  %v2140 = vmax.f32 %v2124, 0.0
  %v2141 = vmax.f32 %v2125, 0.0
  %v2142 = vmax.f32 %v2126, 0.0
  %v2143 = vmax.f32 %v2127, 0.0
  %v2144 = vmax.f32 %v2128, 0.0
  %v2145 = vmax.f32 %v2129, 0.0
  %v2146 = vmax.f32 %v2130, 0.0
  %v2147 = vadd.f32 %v2131, %v36
  %v2148 = vadd.f32 %v2132, %v37
  %v2149 = vadd.f32 %v2133, %v38
  %v2150 = vadd.f32 %v2134, %v39
  %v2151 = vadd.f32 %v2135, %v40
  %v2152 = vadd.f32 %v2136, %v41
  %v2153 = vadd.f32 %v2137, %v42
  %v2154 = vadd.f32 %v2138, %v43
  %v2155 = vadd.f32 %v2139, %v44
  %v2156 = vadd.f32 %v2140, %v45
  %v2157 = vadd.f32 %v2141, %v46
  %v2158 = vadd.f32 %v2142, %v47
  %v2159 = vadd.f32 %v2143, %v48
  %v2160 = vadd.f32 %v2144, %v49
  %v2161 = vadd.f32 %v2145, %v50
  %v2162 = vadd.f32 %v2146, %v51
  %2163 = vst [vmem:[%s9] sm:$0xff] %v2147
  %2164 = vst [vmem:[%s9 + $0x8] sm:$0xff] %v2148
  %2165 = vst [vmem:[%s9 + $0x10] sm:$0xff] %v2149
  %2166 = vst [vmem:[%s9 + $0x18] sm:$0xff] %v2150
  %2167 = vst [vmem:[%s9 + $0x20] sm:$0xff] %v2151
  %2168 = vst [vmem:[%s9 + $0x28] sm:$0xff] %v2152
  %2169 = vst [vmem:[%s9 + $0x30] sm:$0xff] %v2153
  %2170 = vst [vmem:[%s9 + $0x38] sm:$0xff] %v2154
  %2171 = vst [vmem:[%s9 + $0x40] sm:$0xff] %v2155
  %2172 = vst [vmem:[%s9 + $0x48] sm:$0xff] %v2156
  %2173 = vst [vmem:[%s9 + $0x50] sm:$0xff] %v2157
  %2174 = vst [vmem:[%s9 + $0x58] sm:$0xff] %v2158
  %2175 = vst [vmem:[%s9 + $0x60] sm:$0xff] %v2159
  %2176 = vst [vmem:[%s9 + $0x68] sm:$0xff] %v2160
  %2177 = vst [vmem:[%s9 + $0x70] sm:$0xff] %v2161
  %2178 = vst [vmem:[%s9 + $0x78] sm:$0xff] %v2162
  // Predicated region
  $region38: #{improved_rgcn_forward.1} parent=0 // pred_check
    _
  $region39: #{improved_rgcn_forward.1} parent=0 // pred_check_branch
    %2180 = sbr.rel (0) target = $region41
  $region40: #{improved_rgcn_forward.1} parent=0 // pred_region
    _
  $region41: #{improved_rgcn_forward.1} parent=0 // pred_fallthru
    _
  // Predicated region
  $region42: #{improved_rgcn_forward.1} parent=0 // pred_check
    _
  $region43: #{improved_rgcn_forward.1} parent=0 // pred_check_branch
    %2182 = sbr.rel (0) target = $region45
  $region44: #{improved_rgcn_forward.1} parent=0 // pred_region
    _
  $region45: #{improved_rgcn_forward.1} parent=0 // pred_fallthru
    _

</llo_original>
